<compile_context>
chip_gen: v6e
topology: v6e:2x2x1
jax: 0.10.0
libtpu: 0.0.40
codegen_flags: <defaults>
</compile_context>

<pallas_src>
import functools

import jax
import jax.numpy as jnp
from jax import lax
from jax.experimental import pallas as pl
from jax.experimental.pallas import tpu as pltpu


# --------------------------------------------------------------------------
# helpers
# --------------------------------------------------------------------------
def _round_up(x, m):
    return (x + m - 1) // m * m


# --------------------------------------------------------------------------
# Pallas kernels
# --------------------------------------------------------------------------
def _linear_kernel(x_ref, w_ref, b_ref, o_ref, *, apply_relu):
    # bf16 operands feed the MXU; accumulate + bias + ReLU in f32 (v5e-safe).
    acc = jnp.dot(x_ref[...], w_ref[...], preferred_element_type=jnp.float32)
    acc = acc + b_ref[...]                      # (1, N) broadcasts over rows
    if apply_relu:
        acc = jnp.maximum(acc, 0.0)
    o_ref[...] = acc.astype(o_ref.dtype)


def _mlp_kernel(x_ref, w1_ref, b1_ref, w2_ref, b2_ref, o_ref):
    # Fused fc1 + bias + ReLU + fc2 + bias; hidden stays in vregs/VMEM.
    h = jnp.dot(x_ref[...], w1_ref[...], preferred_element_type=jnp.float32)
    h = jnp.maximum(h + b1_ref[...], 0.0)
    acc = jnp.dot(h.astype(jnp.bfloat16), w2_ref[...],
                  preferred_element_type=jnp.float32)
    o_ref[...] = (acc + b2_ref[...]).astype(o_ref.dtype)


# --------------------------------------------------------------------------
# Pallas wrappers (M-tiled grid, weights resident)
# --------------------------------------------------------------------------
def pallas_linear(x, w, b, *, apply_relu, out_dtype, tm=512):
    """x:(M,K)bf16 @ w:(K,N)bf16 + b:(1,N)f32 -> (M,N) out_dtype."""
    M, K = x.shape
    Kw, N = w.shape
    assert K == Kw
    x = x.astype(jnp.bfloat16)
    Mp = _round_up(M, 8)
    if Mp != M:                      # only tiny / odd row counts pay a pad copy
        x = jnp.pad(x, ((0, Mp - M), (0, 0)))
    tm = min(tm, Mp)
    grid = (pl.cdiv(Mp, tm),)
    cost = pl.CostEstimate(
        flops=2 * Mp * K * N,
        transcendentals=0,
        bytes_accessed=2 * (Mp * K + K * N) + 4 * N
        + Mp * N * jnp.dtype(out_dtype).itemsize,
    )
    out = pl.pallas_call(
        functools.partial(_linear_kernel, apply_relu=apply_relu),
        out_shape=jax.ShapeDtypeStruct((Mp, N), out_dtype),
        grid=grid,
        in_specs=[
            pl.BlockSpec((tm, K), lambda i: (i, 0)),   # activations: M-tiled
            pl.BlockSpec((K, N), lambda i: (0, 0)),    # weights resident
            pl.BlockSpec((1, N), lambda i: (0, 0)),    # bias resident
        ],
        out_specs=pl.BlockSpec((tm, N), lambda i: (i, 0)),
        compiler_params=pltpu.CompilerParams(
            dimension_semantics=("parallel",)),        # shard M tiles across TCs
        cost_estimate=cost,
    )(x, w, b)
    return out if Mp == M else out[:M]


def pallas_mlp(x, w1, b1, w2, b2, *, tm=256):
    """Fused MLP: relu(x @ w1 + b1) @ w2 + b2, all in one pallas_call."""
    M, K = x.shape
    K1, F = w1.shape
    assert K == K1 and w2.shape == (F, F)
    x = x.astype(jnp.bfloat16)
    Mp = _round_up(M, 8)
    if Mp != M:
        x = jnp.pad(x, ((0, Mp - M), (0, 0)))
    tm = min(tm, Mp)
    grid = (pl.cdiv(Mp, tm),)
    cost = pl.CostEstimate(
        flops=2 * Mp * K * F + 2 * Mp * F * F,
        transcendentals=0,
        bytes_accessed=2 * (Mp * K + K * F + F * F) + 8 * F + Mp * F * 4,
    )
    out = pl.pallas_call(
        _mlp_kernel,
        out_shape=jax.ShapeDtypeStruct((Mp, F), jnp.float32),
        grid=grid,
        in_specs=[
            pl.BlockSpec((tm, K), lambda i: (i, 0)),
            pl.BlockSpec((K, F), lambda i: (0, 0)),
            pl.BlockSpec((1, F), lambda i: (0, 0)),
            pl.BlockSpec((F, F), lambda i: (0, 0)),
            pl.BlockSpec((1, F), lambda i: (0, 0)),
        ],
        out_specs=pl.BlockSpec((tm, F), lambda i: (i, 0)),
        compiler_params=pltpu.CompilerParams(
            dimension_semantics=("parallel",)),
        cost_estimate=cost,
    )(x, w1, b1, w2, b2)
    return out if Mp == M else out[:M]


# --------------------------------------------------------------------------
# Conv2d (valid padding) = NHWC im2col + Pallas matmul+bias+ReLU
# --------------------------------------------------------------------------
# TODO(synk): patch extraction is still XLA-level glue; folding it into the
# Pallas kernel (per-image grid + shifted accumulating dots) would remove the
# duplicated patch-matrix HBM traffic entirely.
def _im2col_nhwc(x, k, stride):
    B, H, W, C = x.shape
    oh = (H - k) // stride + 1
    ow = (W - k) // stride + 1
    cols = []
    for i in range(k):
        for j in range(k):
            cols.append(lax.slice(
                x, (0, i, j, 0),
                (B, i + stride * (oh - 1) + 1, j + stride * (ow - 1) + 1, C),
                (1, stride, stride, 1)))
    p = jnp.stack(cols, axis=3)                # (B, oh, ow, k*k, C)
    return p.reshape(B * oh * ow, k * k * C), oh, ow


def conv2d_relu_nhwc(x, w_kern, b, k, stride):
    """x:(B,H,W,Cin)bf16, w_kern:(k*k*Cin, Cout)bf16 -> (B,oh,ow,Cout)bf16."""
    B = x.shape[0]
    Cout = w_kern.shape[1]
    patches, oh, ow = _im2col_nhwc(x, k, stride)
    y = pallas_linear(patches, w_kern, b, apply_relu=True,
                      out_dtype=jnp.bfloat16)
    return y.reshape(B, oh, ow, Cout)          # stays NHWC, no transpose


# --------------------------------------------------------------------------
# Parameter init (PyTorch layout, f32) + one-time conversion to kernel layout
# --------------------------------------------------------------------------
def _uniform(key, shape, fan_in):
    bound = 1.0 / (fan_in ** 0.5)
    return jax.random.uniform(key, shape, jnp.float32, -bound, bound)


def init_params(key, input_channels, feature_dim, conv_flat_dim):
    ks = jax.random.split(key, 10)
    p = {}
    p["c1_w"] = _uniform(ks[0], (32, input_channels, 8, 8), input_channels * 64)
    p["c1_b"] = _uniform(ks[1], (32,), input_channels * 64)
    p["c2_w"] = _uniform(ks[2], (64, 32, 4, 4), 32 * 16)
    p["c2_b"] = _uniform(ks[3], (64,), 32 * 16)
    p["c3_w"] = _uniform(ks[4], (64, 64, 3, 3), 64 * 9)
    p["c3_b"] = _uniform(ks[5], (64,), 64 * 9)
    # PyTorch Linear stores weight as (out_features, in_features)
    p["fc1_w"] = _uniform(ks[6], (feature_dim, conv_flat_dim), conv_flat_dim)
    p["fc1_b"] = _uniform(ks[7], (feature_dim,), conv_flat_dim)
    p["fc2_w"] = _uniform(ks[8], (feature_dim, feature_dim), feature_dim)
    p["fc2_b"] = _uniform(ks[9], (feature_dim,), feature_dim)
    return p


def prepare_params(pt, conv_out_hw):
    """One-time conversion of PyTorch-layout f32 params into kernel layout."""
    Hc, Wc = conv_out_hw
    kp = {}
    for name in ("c1", "c2", "c3"):
        w = pt[name + "_w"]                    # (Cout, Cin, kh, kw)
        Cout, Cin, kh, kw = w.shape
        # K ordering (i, j, c) matches the NHWC im2col above.
        kp[name + "_w"] = (w.transpose(2, 3, 1, 0)
                           .reshape(kh * kw * Cin, Cout).astype(jnp.bfloat16))
        kp[name + "_b"] = pt[name + "_b"].astype(jnp.float32).reshape(1, Cout)
    # fc1: permute rows so the NHWC flatten equals PyTorch's NCHW flatten.
    W1 = pt["fc1_w"]                           # (F, C*Hc*Wc)
    F_, CHW = W1.shape
    C3 = CHW // (Hc * Wc)
    w1 = (W1.T.reshape(C3, Hc, Wc, F_)
          .transpose(1, 2, 0, 3).reshape(CHW, F_))
    kp["fc1_w"] = w1.astype(jnp.bfloat16)
    kp["fc1_b"] = pt["fc1_b"].astype(jnp.float32).reshape(1, F_)
    kp["fc2_w"] = pt["fc2_w"].T.astype(jnp.bfloat16)       # (F, F)
    kp["fc2_b"] = pt["fc2_b"].astype(jnp.float32).reshape(1, F_)
    return kp


def conv_output_hw(H, W):
    def o(h, k, s):
        return (h - k) // s + 1
    h, w = o(H, 8, 4), o(W, 8, 4)
    h, w = o(h, 4, 2), o(w, 4, 2)
    h, w = o(h, 3, 1), o(w, 3, 1)
    return h, w


# --------------------------------------------------------------------------
# Forward pass
# --------------------------------------------------------------------------
_CONV_CFG = ((8, 4), (4, 2), (3, 1))           # (kernel, stride)


def atari_feature_model(params, obs):
    # obs is NCHW (PyTorch); go NHWC bf16 once, stay NHWC through the convs.
    x = jnp.transpose(obs, (0, 2, 3, 1)).astype(jnp.bfloat16)
    for idx, (k, s) in enumerate(_CONV_CFG, start=1):
        x = conv2d_relu_nhwc(x, params[f"c{idx}_w"], params[f"c{idx}_b"], k, s)
    # NHWC flatten; fc1 weight rows were pre-permuted so this matches the
    # PyTorch x.reshape(-1, conv.output_dim) (NCHW) semantics.
    x = x.reshape(x.shape[0], -1)
    return pallas_mlp(x, params["fc1_w"], params["fc1_b"],
                      params["fc2_w"], params["fc2_b"])


# --------------------------------------------------------------------------
# Pure-JAX reference (PyTorch semantics, f32) for validation
# --------------------------------------------------------------------------
def reference_forward(pt, obs):
    x = obs
    for name, stride in (("c1", 4), ("c2", 2), ("c3", 1)):
        x = lax.conv_general_dilated(
            x, pt[name + "_w"], (stride, stride), "VALID",
            dimension_numbers=("NCHW", "OIHW", "NCHW"))
        x = jnp.maximum(x + pt[name + "_b"][None, :, None, None], 0.0)
    x = x.reshape(obs.shape[0], -1)            # NCHW flatten
    h = jnp.maximum(x @ pt["fc1_w"].T + pt["fc1_b"], 0.0)
    return h @ pt["fc2_w"].T + pt["fc2_b"]


if __name__ == "__main__":
    key = jax.random.PRNGKey(0)
    k_obs, k_par = jax.random.split(key)

    # Small input consistent with the conv stack: 36x36 single-channel frames.
    # conv1(8,s4): 36 -> 8 ; conv2(4,s2): 8 -> 3 ; conv3(3,s1): 3 -> 1
    B, C, H, W = 2, 1, 36, 36
    feature_dim = 512
    obs = jax.random.uniform(k_obs, (B, C, H, W), jnp.float32)

    Hc, Wc = conv_output_hw(H, W)
    conv_flat_dim = 64 * Hc * Wc               # self.conv.output_dim
    pt_params = init_params(k_par, input_channels=C, feature_dim=feature_dim,
                            conv_flat_dim=conv_flat_dim)
    params = prepare_params(pt_params, (Hc, Wc))

    fwd = jax.jit(atari_feature_model)
    out = jax.block_until_ready(fwd(params, obs))
    assert out.shape == (B, feature_dim), out.shape
    assert bool(jnp.all(jnp.isfinite(out)))

    # Validate against the f32 reference (bf16 operands -> relaxed tolerance).
    ref = reference_forward(pt_params, obs)
    assert jnp.allclose(out, ref, atol=3e-2, rtol=3e-2), float(
        jnp.max(jnp.abs(out - ref)))
    print("KERNEL_OK")
</pallas_src>

<mosaic_0001>
module attributes {stable_mosaic.version = 11 : i64} {
  func.func @_linear_kernel(%arg0: i32, %arg1: memref<128x64xbf16, #tpu.memory_space<vmem>>, %arg2: memref<64x32xbf16, #tpu.memory_space<vmem>>, %arg3: memref<1x32xf32, #tpu.memory_space<vmem>>, %arg4: memref<128x32xbf16, #tpu.memory_space<vmem>>) attributes {dimension_semantics = [#tpu.dimension_semantics<parallel>], iteration_bounds = array<i64: 1>, scalar_prefetch = 0 : i64, scratch_operands = 0 : i64, tpu.core_type = #tpu.core_type<tc>, window_params = [{transform_indices = @transform_0, window_bounds = array<i64: 128, 64>}, {pipeline_mode = #tpu.pipeline_mode<synchronous>, transform_indices = @transform_1, window_bounds = array<i64: 64, 32>}, {pipeline_mode = #tpu.pipeline_mode<synchronous>, transform_indices = @transform_2, window_bounds = array<i64: 1, 32>}, {transform_indices = @transform_3, window_bounds = array<i64: 128, 32>}]} {
    %c0 = arith.constant 0 : index
    %c0_0 = arith.constant 0 : index
    %0 = vector.load %arg1[%c0, %c0_0] : memref<128x64xbf16, #tpu.memory_space<vmem>>, vector<128x64xbf16>
    %c0_1 = arith.constant 0 : index
    %c0_2 = arith.constant 0 : index
    %1 = vector.load %arg2[%c0_1, %c0_2] : memref<64x32xbf16, #tpu.memory_space<vmem>>, vector<64x32xbf16>
    %cst = arith.constant dense<0.000000e+00> : vector<128x32xf32>
    %2 = tpu.matmul %0, %1, %cst {dimension_numbers = #tpu.dot_dimension_numbers<[1], [0], [0], [1], [0, 0, 1, 1], [], []>} : vector<128x64xbf16>, vector<64x32xbf16>, vector<128x32xf32> -> vector<128x32xf32>
    %c0_3 = arith.constant 0 : index
    %c0_4 = arith.constant 0 : index
    %3 = vector.load %arg3[%c0_3, %c0_4] : memref<1x32xf32, #tpu.memory_space<vmem>>, vector<1x32xf32>
    %4 = vector.broadcast %3 : vector<1x32xf32> to vector<128x32xf32>
    %5 = arith.addf %2, %4 : vector<128x32xf32>
    %cst_5 = arith.constant 0.000000e+00 : f32
    %6 = vector.broadcast %cst_5 : f32 to vector<128x32xf32>
    %7 = arith.maximumf %5, %6 : vector<128x32xf32>
    %8 = arith.truncf %7 : vector<128x32xf32> to vector<128x32xbf16>
    %c0_6 = arith.constant 0 : index
    %c0_7 = arith.constant 0 : index
    %9 = vector.load %arg4[%c0_6, %c0_7] : memref<128x32xbf16, #tpu.memory_space<vmem>>, vector<128x32xbf16>
    tpu.vector_store %arg4[%c0_6, %c0_7], %8 {strides = array<i32>} : memref<128x32xbf16, #tpu.memory_space<vmem>>, vector<128x32xbf16>,
    return
  }
  func.func @transform_0(%arg0: i32) -> (i32, i32) {
    %c0_i32 = arith.constant 0 : i32
    %c0_i32_0 = arith.constant 0 : i32
    return %arg0, %c0_i32 : i32, i32
  }
  func.func @transform_1(%arg0: i32) -> (i32, i32) {
    %c0_i32 = arith.constant 0 : i32
    %c0_i32_0 = arith.constant 0 : i32
    %c0_i32_1 = arith.constant 0 : i32
    return %c0_i32, %c0_i32_0 : i32, i32
  }
  func.func @transform_2(%arg0: i32) -> (i32, i32) {
    %c0_i32 = arith.constant 0 : i32
    %c0_i32_0 = arith.constant 0 : i32
    %c0_i32_1 = arith.constant 0 : i32
    return %c0_i32, %c0_i32_0 : i32, i32
  }
  func.func @transform_3(%arg0: i32) -> (i32, i32) {
    %c0_i32 = arith.constant 0 : i32
    %c0_i32_0 = arith.constant 0 : i32
    return %arg0, %c0_i32 : i32, i32
  }
}

module attributes {stable_mosaic.version = 11 : i64} {
  func.func @_linear_kernel(%arg0: i32, %arg1: memref<24x512xbf16, #tpu.memory_space<vmem>>, %arg2: memref<512x64xbf16, #tpu.memory_space<vmem>>, %arg3: memref<1x64xf32, #tpu.memory_space<vmem>>, %arg4: memref<24x64xbf16, #tpu.memory_space<vmem>>) attributes {dimension_semantics = [#tpu.dimension_semantics<parallel>], iteration_bounds = array<i64: 1>, scalar_prefetch = 0 : i64, scratch_operands = 0 : i64, tpu.core_type = #tpu.core_type<tc>, window_params = [{transform_indices = @transform_0, window_bounds = array<i64: 24, 512>}, {pipeline_mode = #tpu.pipeline_mode<synchronous>, transform_indices = @transform_1, window_bounds = array<i64: 512, 64>}, {pipeline_mode = #tpu.pipeline_mode<synchronous>, transform_indices = @transform_2, window_bounds = array<i64: 1, 64>}, {transform_indices = @transform_3, window_bounds = array<i64: 24, 64>}]} {
    %c0 = arith.constant 0 : index
    %c0_0 = arith.constant 0 : index
    %0 = vector.load %arg1[%c0, %c0_0] : memref<24x512xbf16, #tpu.memory_space<vmem>>, vector<24x512xbf16>
    %c0_1 = arith.constant 0 : index
    %c0_2 = arith.constant 0 : index
    %1 = vector.load %arg2[%c0_1, %c0_2] : memref<512x64xbf16, #tpu.memory_space<vmem>>, vector<512x64xbf16>
    %cst = arith.constant dense<0.000000e+00> : vector<24x64xf32>
    %2 = tpu.matmul %0, %1, %cst {dimension_numbers = #tpu.dot_dimension_numbers<[1], [0], [0], [1], [0, 0, 1, 1], [], []>} : vector<24x512xbf16>, vector<512x64xbf16>, vector<24x64xf32> -> vector<24x64xf32>
    %c0_3 = arith.constant 0 : index
    %c0_4 = arith.constant 0 : index
    %3 = vector.load %arg3[%c0_3, %c0_4] : memref<1x64xf32, #tpu.memory_space<vmem>>, vector<1x64xf32>
    %4 = vector.broadcast %3 : vector<1x64xf32> to vector<24x64xf32>
    %5 = arith.addf %2, %4 : vector<24x64xf32>
    %cst_5 = arith.constant 0.000000e+00 : f32
    %6 = vector.broadcast %cst_5 : f32 to vector<24x64xf32>
    %7 = arith.maximumf %5, %6 : vector<24x64xf32>
    %8 = arith.truncf %7 : vector<24x64xf32> to vector<24x64xbf16>
    %c0_6 = arith.constant 0 : index
    %c0_7 = arith.constant 0 : index
    %9 = vector.load %arg4[%c0_6, %c0_7] : memref<24x64xbf16, #tpu.memory_space<vmem>>, vector<24x64xbf16>
    tpu.vector_store %arg4[%c0_6, %c0_7], %8 {strides = array<i32>} : memref<24x64xbf16, #tpu.memory_space<vmem>>, vector<24x64xbf16>,
    return
  }
  func.func @transform_0(%arg0: i32) -> (i32, i32) {
    %c0_i32 = arith.constant 0 : i32
    %c0_i32_0 = arith.constant 0 : i32
    return %arg0, %c0_i32 : i32, i32
  }
  func.func @transform_1(%arg0: i32) -> (i32, i32) {
    %c0_i32 = arith.constant 0 : i32
    %c0_i32_0 = arith.constant 0 : i32
    %c0_i32_1 = arith.constant 0 : i32
    return %c0_i32, %c0_i32_0 : i32, i32
  }
  func.func @transform_2(%arg0: i32) -> (i32, i32) {
    %c0_i32 = arith.constant 0 : i32
    %c0_i32_0 = arith.constant 0 : i32
    %c0_i32_1 = arith.constant 0 : i32
    return %c0_i32, %c0_i32_0 : i32, i32
  }
  func.func @transform_3(%arg0: i32) -> (i32, i32) {
    %c0_i32 = arith.constant 0 : i32
    %c0_i32_0 = arith.constant 0 : i32
    return %arg0, %c0_i32 : i32, i32
  }
}

module attributes {stable_mosaic.version = 11 : i64} {
  func.func @_linear_kernel(%arg0: i32, %arg1: memref<8x576xbf16, #tpu.memory_space<vmem>>, %arg2: memref<576x64xbf16, #tpu.memory_space<vmem>>, %arg3: memref<1x64xf32, #tpu.memory_space<vmem>>, %arg4: memref<8x64xbf16, #tpu.memory_space<vmem>>) attributes {dimension_semantics = [#tpu.dimension_semantics<parallel>], iteration_bounds = array<i64: 1>, scalar_prefetch = 0 : i64, scratch_operands = 0 : i64, tpu.core_type = #tpu.core_type<tc>, window_params = [{transform_indices = @transform_0, window_bounds = array<i64: 8, 576>}, {pipeline_mode = #tpu.pipeline_mode<synchronous>, transform_indices = @transform_1, window_bounds = array<i64: 576, 64>}, {pipeline_mode = #tpu.pipeline_mode<synchronous>, transform_indices = @transform_2, window_bounds = array<i64: 1, 64>}, {transform_indices = @transform_3, window_bounds = array<i64: 8, 64>}]} {
    %c0 = arith.constant 0 : index
    %c0_0 = arith.constant 0 : index
    %0 = vector.load %arg1[%c0, %c0_0] : memref<8x576xbf16, #tpu.memory_space<vmem>>, vector<8x576xbf16>
    %c0_1 = arith.constant 0 : index
    %c0_2 = arith.constant 0 : index
    %1 = vector.load %arg2[%c0_1, %c0_2] : memref<576x64xbf16, #tpu.memory_space<vmem>>, vector<576x64xbf16>
    %cst = arith.constant dense<0.000000e+00> : vector<8x64xf32>
    %2 = tpu.matmul %0, %1, %cst {dimension_numbers = #tpu.dot_dimension_numbers<[1], [0], [0], [1], [0, 0, 1, 1], [], []>} : vector<8x576xbf16>, vector<576x64xbf16>, vector<8x64xf32> -> vector<8x64xf32>
    %c0_3 = arith.constant 0 : index
    %c0_4 = arith.constant 0 : index
    %3 = vector.load %arg3[%c0_3, %c0_4] : memref<1x64xf32, #tpu.memory_space<vmem>>, vector<1x64xf32>
    %4 = vector.broadcast %3 : vector<1x64xf32> to vector<8x64xf32>
    %5 = arith.addf %2, %4 : vector<8x64xf32>
    %cst_5 = arith.constant 0.000000e+00 : f32
    %6 = vector.broadcast %cst_5 : f32 to vector<8x64xf32>
    %7 = arith.maximumf %5, %6 : vector<8x64xf32>
    %8 = arith.truncf %7 : vector<8x64xf32> to vector<8x64xbf16>
    %c0_6 = arith.constant 0 : index
    %c0_7 = arith.constant 0 : index
    %9 = vector.load %arg4[%c0_6, %c0_7] : memref<8x64xbf16, #tpu.memory_space<vmem>>, vector<8x64xbf16>
    tpu.vector_store %arg4[%c0_6, %c0_7], %8 {strides = array<i32>} : memref<8x64xbf16, #tpu.memory_space<vmem>>, vector<8x64xbf16>,
    return
  }
  func.func @transform_0(%arg0: i32) -> (i32, i32) {
    %c0_i32 = arith.constant 0 : i32
    %c0_i32_0 = arith.constant 0 : i32
    return %arg0, %c0_i32 : i32, i32
  }
  func.func @transform_1(%arg0: i32) -> (i32, i32) {
    %c0_i32 = arith.constant 0 : i32
    %c0_i32_0 = arith.constant 0 : i32
    %c0_i32_1 = arith.constant 0 : i32
    return %c0_i32, %c0_i32_0 : i32, i32
  }
  func.func @transform_2(%arg0: i32) -> (i32, i32) {
    %c0_i32 = arith.constant 0 : i32
    %c0_i32_0 = arith.constant 0 : i32
    %c0_i32_1 = arith.constant 0 : i32
    return %c0_i32, %c0_i32_0 : i32, i32
  }
  func.func @transform_3(%arg0: i32) -> (i32, i32) {
    %c0_i32 = arith.constant 0 : i32
    %c0_i32_0 = arith.constant 0 : i32
    return %arg0, %c0_i32 : i32, i32
  }
}

module attributes {stable_mosaic.version = 11 : i64} {
  func.func @_mlp_kernel(%arg0: i32, %arg1: memref<8x64xbf16, #tpu.memory_space<vmem>>, %arg2: memref<64x512xbf16, #tpu.memory_space<vmem>>, %arg3: memref<1x512xf32, #tpu.memory_space<vmem>>, %arg4: memref<512x512xbf16, #tpu.memory_space<vmem>>, %arg5: memref<1x512xf32, #tpu.memory_space<vmem>>, %arg6: memref<8x512xf32, #tpu.memory_space<vmem>>) attributes {dimension_semantics = [#tpu.dimension_semantics<parallel>], iteration_bounds = array<i64: 1>, scalar_prefetch = 0 : i64, scratch_operands = 0 : i64, tpu.core_type = #tpu.core_type<tc>, window_params = [{transform_indices = @transform_0, window_bounds = array<i64: 8, 64>}, {pipeline_mode = #tpu.pipeline_mode<synchronous>, transform_indices = @transform_1, window_bounds = array<i64: 64, 512>}, {pipeline_mode = #tpu.pipeline_mode<synchronous>, transform_indices = @transform_2, window_bounds = array<i64: 1, 512>}, {pipeline_mode = #tpu.pipeline_mode<synchronous>, transform_indices = @transform_3, window_bounds = array<i64: 512, 512>}, {pipeline_mode = #tpu.pipeline_mode<synchronous>, transform_indices = @transform_4, window_bounds = array<i64: 1, 512>}, {transform_indices = @transform_5, window_bounds = array<i64: 8, 512>}]} {
    %c0 = arith.constant 0 : index
    %c0_0 = arith.constant 0 : index
    %0 = vector.load %arg1[%c0, %c0_0] : memref<8x64xbf16, #tpu.memory_space<vmem>>, vector<8x64xbf16>
    %c0_1 = arith.constant 0 : index
    %c0_2 = arith.constant 0 : index
    %1 = vector.load %arg2[%c0_1, %c0_2] : memref<64x512xbf16, #tpu.memory_space<vmem>>, vector<64x512xbf16>
    %cst = arith.constant dense<0.000000e+00> : vector<8x512xf32>
    %2 = tpu.matmul %0, %1, %cst {dimension_numbers = #tpu.dot_dimension_numbers<[1], [0], [0], [1], [0, 0, 1, 1], [], []>} : vector<8x64xbf16>, vector<64x512xbf16>, vector<8x512xf32> -> vector<8x512xf32>
    %c0_3 = arith.constant 0 : index
    %c0_4 = arith.constant 0 : index
    %3 = vector.load %arg3[%c0_3, %c0_4] : memref<1x512xf32, #tpu.memory_space<vmem>>, vector<1x512xf32>
    %4 = vector.broadcast %3 : vector<1x512xf32> to vector<8x512xf32>
    %5 = arith.addf %2, %4 : vector<8x512xf32>
    %cst_5 = arith.constant 0.000000e+00 : f32
    %6 = vector.broadcast %cst_5 : f32 to vector<8x512xf32>
    %7 = arith.maximumf %5, %6 : vector<8x512xf32>
    %8 = arith.truncf %7 : vector<8x512xf32> to vector<8x512xbf16>
    %c0_6 = arith.constant 0 : index
    %c0_7 = arith.constant 0 : index
    %9 = vector.load %arg4[%c0_6, %c0_7] : memref<512x512xbf16, #tpu.memory_space<vmem>>, vector<512x512xbf16>
    %cst_8 = arith.constant dense<0.000000e+00> : vector<8x512xf32>
    %10 = tpu.matmul %8, %9, %cst_8 {dimension_numbers = #tpu.dot_dimension_numbers<[1], [0], [0], [1], [0, 0, 1, 1], [], []>} : vector<8x512xbf16>, vector<512x512xbf16>, vector<8x512xf32> -> vector<8x512xf32>
    %c0_9 = arith.constant 0 : index
    %c0_10 = arith.constant 0 : index
    %11 = vector.load %arg5[%c0_9, %c0_10] : memref<1x512xf32, #tpu.memory_space<vmem>>, vector<1x512xf32>
    %12 = vector.broadcast %11 : vector<1x512xf32> to vector<8x512xf32>
    %13 = arith.addf %10, %12 : vector<8x512xf32>
    %c0_11 = arith.constant 0 : index
    %c0_12 = arith.constant 0 : index
    %14 = vector.load %arg6[%c0_11, %c0_12] : memref<8x512xf32, #tpu.memory_space<vmem>>, vector<8x512xf32>
    tpu.vector_store %arg6[%c0_11, %c0_12], %13 {strides = array<i32>} : memref<8x512xf32, #tpu.memory_space<vmem>>, vector<8x512xf32>,
    return
  }
  func.func @transform_0(%arg0: i32) -> (i32, i32) {
    %c0_i32 = arith.constant 0 : i32
    %c0_i32_0 = arith.constant 0 : i32
    return %arg0, %c0_i32 : i32, i32
  }
  func.func @transform_1(%arg0: i32) -> (i32, i32) {
    %c0_i32 = arith.constant 0 : i32
    %c0_i32_0 = arith.constant 0 : i32
    %c0_i32_1 = arith.constant 0 : i32
    return %c0_i32, %c0_i32_0 : i32, i32
  }
  func.func @transform_2(%arg0: i32) -> (i32, i32) {
    %c0_i32 = arith.constant 0 : i32
    %c0_i32_0 = arith.constant 0 : i32
    %c0_i32_1 = arith.constant 0 : i32
    return %c0_i32, %c0_i32_0 : i32, i32
  }
  func.func @transform_3(%arg0: i32) -> (i32, i32) {
    %c0_i32 = arith.constant 0 : i32
    %c0_i32_0 = arith.constant 0 : i32
    %c0_i32_1 = arith.constant 0 : i32
    return %c0_i32, %c0_i32_0 : i32, i32
  }
  func.func @transform_4(%arg0: i32) -> (i32, i32) {
    %c0_i32 = arith.constant 0 : i32
    %c0_i32_0 = arith.constant 0 : i32
    %c0_i32_1 = arith.constant 0 : i32
    return %c0_i32, %c0_i32_0 : i32, i32
  }
  func.func @transform_5(%arg0: i32) -> (i32, i32) {
    %c0_i32 = arith.constant 0 : i32
    %c0_i32_0 = arith.constant 0 : i32
    return %arg0, %c0_i32 : i32, i32
  }
}

</mosaic_0001>

<llo_original>
// kernel: atari_feature_model.4
$region0: #{atari_feature_model.4}
  #allocation0 [shape = 'u32[]', space=smem, size = 0x4, offset = 0x4, fixed_abs, tag = 'smem constant byte address 0x4 - core index']
  #allocation1 [shape = 'u32[144,128]{1,0:T(1,128)}', space=vmem, size = 0x12000, scoped, tag = 'internal scratch']
  %s0 = inlined_call_operand.vmem [shape: bf16[128,64], index: 0, kind: input, shape index: {}]
  %s1 = inlined_call_operand.vmem [shape: bf16[64,32], index: 1, kind: input, shape index: {}]
  %s2 = inlined_call_operand.vmem [shape: f32[1,32], index: 2, kind: input, shape index: {}]
  %s3 = inlined_call_operand.vmem [shape: bf16[128,32], index: 3, kind: output, shape index: {}]
  %s4 = sld [smem:[#allocation0]]
  $region22: #{atari_feature_model.4} parent=0
    _
  %s6 = ssub.s32 1, %s4
  %s7 = scalar_select 0, %s6, %s4
  // Predicated region
  $region2: #{atari_feature_model.4} parent=0 // pred_check
    _
  $region3: #{atari_feature_model.4} parent=0 // pred_check_branch
    %9 = sbr.rel (0) target = $region5
  $region4: #{atari_feature_model.4} parent=0 // pred_region
    _
  $region5: #{atari_feature_model.4} parent=0 // pred_fallthru
    _
  // Predicated region
  $region6: #{atari_feature_model.4} parent=0 // pred_check
    _
  $region7: #{atari_feature_model.4} parent=0 // pred_check_branch
    %11 = sbr.rel (0) target = $region9
  $region8: #{atari_feature_model.4} parent=0 // pred_region
    _
  $region9: #{atari_feature_model.4} parent=0 // pred_fallthru
    _
  // Predicated region
  $region10: #{atari_feature_model.4} parent=0 // pred_check
    _
  $region11: #{atari_feature_model.4} parent=0 // pred_check_branch
    %13 = sbr.rel (0) target = $region13
  $region12: #{atari_feature_model.4} parent=0 // pred_region
    _
  $region13: #{atari_feature_model.4} parent=0 // pred_fallthru
    _
  %v15 = vld [vmem:[%s0] sm:$0xf]
  %v16 = vld [vmem:[%s0 + $0x4] sm:$0xf]
  %v17 = vld [vmem:[%s0 + $0x8] sm:$0xf]
  %v18 = vld [vmem:[%s0 + $0xc] sm:$0xf]
  %v19 = vld [vmem:[%s0 + $0x10] sm:$0xf]
  %v20 = vld [vmem:[%s0 + $0x14] sm:$0xf]
  %v21 = vld [vmem:[%s0 + $0x18] sm:$0xf]
  %v22 = vld [vmem:[%s0 + $0x1c] sm:$0xf]
  %v23 = vld [vmem:[%s0 + $0x20] sm:$0xf]
  %v24 = vld [vmem:[%s0 + $0x24] sm:$0xf]
  %v25 = vld [vmem:[%s0 + $0x28] sm:$0xf]
  %v26 = vld [vmem:[%s0 + $0x2c] sm:$0xf]
  %v27 = vld [vmem:[%s0 + $0x30] sm:$0xf]
  %v28 = vld [vmem:[%s0 + $0x34] sm:$0xf]
  %v29 = vld [vmem:[%s0 + $0x38] sm:$0xf]
  %v30 = vld [vmem:[%s0 + $0x3c] sm:$0xf]
  %v31 = vld [vmem:[%s1] sm:$0xf]
  %v32 = vld [vmem:[%s1 + $0x4] sm:$0xf]
  %v33 = vld [vmem:[%s1 + $0x8] sm:$0xf]
  %v34 = vld [vmem:[%s1 + $0xc] sm:$0xf]
  %v35 = vld [vmem:[%s1 + $0x10] sm:$0xf]
  %v36 = vld [vmem:[%s1 + $0x14] sm:$0xf]
  %v37 = vld [vmem:[%s1 + $0x18] sm:$0xf]
  %v38 = vld [vmem:[%s1 + $0x1c] sm:$0xf]
  %v39 = vld [vmem:[%s2] sm:$0x1]
  %v41 = vlaneseq
  %v42 = vshrl.u32 %v41, 7
  %v43 = vsub.s32 0, %v42
  %v44 = vrot.slane %v39, %v43
  %v62 = vunpack.c.l.b16 %v15
  %v63 = vunpack.c.l.b16 %v16
  %v64 = vunpack.c.l.b16 %v17
  %v65 = vunpack.c.l.b16 %v18
  %v66 = vunpack.c.l.b16 %v19
  %v67 = vunpack.c.l.b16 %v20
  %v68 = vunpack.c.l.b16 %v21
  %v69 = vunpack.c.l.b16 %v22
  %v70 = vunpack.c.l.b16 %v23
  %v71 = vunpack.c.l.b16 %v24
  %v72 = vunpack.c.l.b16 %v25
  %v73 = vunpack.c.l.b16 %v26
  %v74 = vunpack.c.l.b16 %v27
  %v75 = vunpack.c.l.b16 %v28
  %v76 = vunpack.c.l.b16 %v29
  %v77 = vunpack.c.l.b16 %v30
  %v78 = vpack.c.b16 %v63, %v62
  %v79 = vpack.c.b16 %v65, %v64
  %v80 = vpack.c.b16 %v67, %v66
  %v81 = vpack.c.b16 %v69, %v68
  %v82 = vpack.c.b16 %v71, %v70
  %v83 = vpack.c.b16 %v73, %v72
  %v84 = vpack.c.b16 %v75, %v74
  %v85 = vpack.c.b16 %v77, %v76
  %v94 = vunpack.c.l.b16 %v31
  %v95 = vunpack.c.l.b16 %v32
  %v96 = vunpack.c.l.b16 %v33
  %v97 = vunpack.c.l.b16 %v34
  %v98 = vunpack.c.l.b16 %v35
  %v99 = vunpack.c.l.b16 %v36
  %v100 = vunpack.c.l.b16 %v37
  %v101 = vunpack.c.l.b16 %v38
  %v102 = vpack.c.b16 %v95, %v94
  %v103 = vpack.c.b16 %v97, %v96
  %v104 = vpack.c.b16 %v99, %v98
  %v105 = vpack.c.b16 %v101, %v100
  %vm110 = vcmask 523264
  %v112 = vsel %vm110, %v78, 0
  %v115 = vsel %vm110, %v79, 0
  %v118 = vsel %vm110, %v80, 0
  %v121 = vsel %vm110, %v81, 0
  %v124 = vsel %vm110, %v82, 0
  %v127 = vsel %vm110, %v83, 0
  %v130 = vsel %vm110, %v84, 0
  %v133 = vsel %vm110, %v85, 0
  %135 = vmatprep.subr.bf16.mxu0 0
  %136 = vmatpush1.bf16.msra.mxu0 0
  %137 = vmatprep.subr.bf16.mxu0 0
  %138 = vmatpush1.bf16.msra.mxu0 0
  %139 = vmatprep.subr.bf16.mxu0 0
  %140 = vmatpush1.bf16.msra.mxu0 0
  %141 = vmatprep.subr.bf16.mxu0 0
  %142 = vmatpush1.bf16.msra.mxu0 0
  %143 = vmatprep.subr.bf16.mxu0 0
  %144 = vmatpush1.bf16.msra.mxu0 %v105
  %145 = vmatprep.subr.bf16.mxu0 0
  %146 = vmatpush1.bf16.msra.mxu0 %v104
  %147 = vmatprep.subr.bf16.mxu0 0
  %148 = vmatpush1.bf16.msra.mxu0 %v103
  %149 = vmatprep.subr.bf16.mxu0 0
  %150 = vmatpush1.bf16.msra.mxu0 %v102
  %151 = vmatprep.subr.bf16.mxu0 0
  %152 = vmatpush2.bf16.msra.mxu0 0
  %153 = vmatprep.subr.bf16.mxu0 0
  %154 = vmatpush2.bf16.msra.mxu0 0
  %155 = vmatprep.subr.bf16.mxu0 0
  %156 = vmatpush2.bf16.msra.mxu0 0
  %157 = vmatprep.subr.bf16.mxu0 0
  %158 = vmatpush2.bf16.msra.mxu0 0
  %159 = vmatprep.subr.bf16.mxu0 0
  %160 = vmatpush2.bf16.msra.mxu0 0
  %161 = vmatprep.subr.bf16.mxu0 0
  %162 = vmatpush2.bf16.msra.mxu0 0
  %163 = vmatprep.subr.bf16.mxu0 0
  %164 = vmatpush2.bf16.msra.mxu0 0
  %165 = vmatprep.subr.bf16.mxu0 0
  %166 = vmatpush2.bf16.msra.mxu0 0
  %167 = vmatprep.mubr.bf16.mxu0 0
  %168 = vmatmul.mubr.bf16.gmra.mxu0 %v112
  %v169 = vpop.f32.mrf.mxu0
  %v170 = vadd.f32 %v44, %v169
  %v171 = vpop.f32.mrf.mxu0
  %v172 = vpop.f32.mrf.mxu0
  %v173 = vadd.f32 %v44, %v172
  %v174 = vpop.f32.mrf.mxu0
  %175 = vmatprep.mubr.bf16.mxu0 0
  %176 = vmatmul.mubr.bf16.gmra.mxu0 %v115
  %v177 = vpop.f32.mrf.mxu0
  %v178 = vadd.f32 %v44, %v177
  %v179 = vpop.f32.mrf.mxu0
  %v180 = vpop.f32.mrf.mxu0
  %v181 = vadd.f32 %v44, %v180
  %v182 = vpop.f32.mrf.mxu0
  %183 = vmatprep.mubr.bf16.mxu0 0
  %184 = vmatmul.mubr.bf16.gmra.mxu0 %v118
  %v185 = vpop.f32.mrf.mxu0
  %v186 = vadd.f32 %v44, %v185
  %v187 = vpop.f32.mrf.mxu0
  %v188 = vpop.f32.mrf.mxu0
  %v189 = vadd.f32 %v44, %v188
  %v190 = vpop.f32.mrf.mxu0
  %191 = vmatprep.mubr.bf16.mxu0 0
  %192 = vmatmul.mubr.bf16.gmra.mxu0 %v121
  %v193 = vpop.f32.mrf.mxu0
  %v194 = vadd.f32 %v44, %v193
  %v195 = vpop.f32.mrf.mxu0
  %v196 = vpop.f32.mrf.mxu0
  %v197 = vadd.f32 %v44, %v196
  %v198 = vpop.f32.mrf.mxu0
  %199 = vmatprep.mubr.bf16.mxu0 0
  %200 = vmatmul.mubr.bf16.gmra.mxu0 %v124
  %v201 = vpop.f32.mrf.mxu0
  %v202 = vadd.f32 %v44, %v201
  %v203 = vpop.f32.mrf.mxu0
  %v204 = vpop.f32.mrf.mxu0
  %v205 = vadd.f32 %v44, %v204
  %v206 = vpop.f32.mrf.mxu0
  %207 = vmatprep.mubr.bf16.mxu0 0
  %208 = vmatmul.mubr.bf16.gmra.mxu0 %v127
  %v209 = vpop.f32.mrf.mxu0
  %v210 = vadd.f32 %v44, %v209
  %v211 = vpop.f32.mrf.mxu0
  %v212 = vpop.f32.mrf.mxu0
  %v213 = vadd.f32 %v44, %v212
  %v214 = vpop.f32.mrf.mxu0
  %215 = vmatprep.mubr.bf16.mxu0 0
  %216 = vmatmul.mubr.bf16.gmra.mxu0 %v130
  %v217 = vpop.f32.mrf.mxu0
  %v218 = vadd.f32 %v44, %v217
  %v219 = vpop.f32.mrf.mxu0
  %v220 = vpop.f32.mrf.mxu0
  %v221 = vadd.f32 %v44, %v220
  %v222 = vpop.f32.mrf.mxu0
  %223 = vmatprep.mubr.bf16.mxu0 0
  %224 = vmatmul.mubr.bf16.gmra.mxu0 %v133
  %v225 = vpop.f32.mrf.mxu0
  %v226 = vadd.f32 %v44, %v225
  %v227 = vpop.f32.mrf.mxu0
  %v228 = vpop.f32.mrf.mxu0
  %v229 = vadd.f32 %v44, %v228
  %v230 = vpop.f32.mrf.mxu0
  %231 = vdwg.mxu0
  %v232 = vmax.f32 %v170, 0.0
  %v233 = vmax.f32 %v173, 0.0
  %v234 = vmax.f32 %v178, 0.0
  %v235 = vmax.f32 %v181, 0.0
  %v236 = vmax.f32 %v186, 0.0
  %v237 = vmax.f32 %v189, 0.0
  %v238 = vmax.f32 %v194, 0.0
  %v239 = vmax.f32 %v197, 0.0
  %v240 = vmax.f32 %v202, 0.0
  %v241 = vmax.f32 %v205, 0.0
  %v242 = vmax.f32 %v210, 0.0
  %v243 = vmax.f32 %v213, 0.0
  %v244 = vmax.f32 %v218, 0.0
  %v245 = vmax.f32 %v221, 0.0
  %v246 = vmax.f32 %v226, 0.0
  %v247 = vmax.f32 %v229, 0.0
  %v248 = vpack.c.bf16 %v233, %v232
  %v249 = vpack.c.bf16 %v235, %v234
  %v250 = vpack.c.bf16 %v237, %v236
  %v251 = vpack.c.bf16 %v239, %v238
  %v252 = vpack.c.bf16 %v241, %v240
  %v253 = vpack.c.bf16 %v243, %v242
  %v254 = vpack.c.bf16 %v245, %v244
  %v255 = vpack.c.bf16 %v247, %v246
  %v264 = vunpack.c.l.b16 %v248
  %v265 = vunpack.c.h.b16 %v248
  %v266 = vunpack.c.l.b16 %v249
  %v267 = vunpack.c.h.b16 %v249
  %v268 = vunpack.c.l.b16 %v250
  %v269 = vunpack.c.h.b16 %v250
  %v270 = vunpack.c.l.b16 %v251
  %v271 = vunpack.c.h.b16 %v251
  %v272 = vunpack.c.l.b16 %v252
  %v273 = vunpack.c.h.b16 %v252
  %v274 = vunpack.c.l.b16 %v253
  %v275 = vunpack.c.h.b16 %v253
  %v276 = vunpack.c.l.b16 %v254
  %v277 = vunpack.c.h.b16 %v254
  %v278 = vunpack.c.l.b16 %v255
  %v279 = vunpack.c.h.b16 %v255
  %v280 = vpack.c.b16 %v264, %v264
  %v281 = vpack.c.b16 %v265, %v265
  %v282 = vpack.c.b16 %v266, %v266
  %v283 = vpack.c.b16 %v267, %v267
  %v284 = vpack.c.b16 %v268, %v268
  %v285 = vpack.c.b16 %v269, %v269
  %v286 = vpack.c.b16 %v270, %v270
  %v287 = vpack.c.b16 %v271, %v271
  %v288 = vpack.c.b16 %v272, %v272
  %v289 = vpack.c.b16 %v273, %v273
  %v290 = vpack.c.b16 %v274, %v274
  %v291 = vpack.c.b16 %v275, %v275
  %v292 = vpack.c.b16 %v276, %v276
  %v293 = vpack.c.b16 %v277, %v277
  %v294 = vpack.c.b16 %v278, %v278
  %v295 = vpack.c.b16 %v279, %v279
  %vm312 = vcmask 257024
  %313 = vst.msk [vmem:[%s3] sm:$0xf] %vm312, %v280
  %314 = vst.msk [vmem:[%s3 + $0x4] sm:$0xf] %vm312, %v281
  %315 = vst.msk [vmem:[%s3 + $0x8] sm:$0xf] %vm312, %v282
  %316 = vst.msk [vmem:[%s3 + $0xc] sm:$0xf] %vm312, %v283
  %317 = vst.msk [vmem:[%s3 + $0x10] sm:$0xf] %vm312, %v284
  %318 = vst.msk [vmem:[%s3 + $0x14] sm:$0xf] %vm312, %v285
  %319 = vst.msk [vmem:[%s3 + $0x18] sm:$0xf] %vm312, %v286
  %320 = vst.msk [vmem:[%s3 + $0x1c] sm:$0xf] %vm312, %v287
  %321 = vst.msk [vmem:[%s3 + $0x20] sm:$0xf] %vm312, %v288
  %322 = vst.msk [vmem:[%s3 + $0x24] sm:$0xf] %vm312, %v289
  %323 = vst.msk [vmem:[%s3 + $0x28] sm:$0xf] %vm312, %v290
  %324 = vst.msk [vmem:[%s3 + $0x2c] sm:$0xf] %vm312, %v291
  %325 = vst.msk [vmem:[%s3 + $0x30] sm:$0xf] %vm312, %v292
  %326 = vst.msk [vmem:[%s3 + $0x34] sm:$0xf] %vm312, %v293
  %327 = vst.msk [vmem:[%s3 + $0x38] sm:$0xf] %vm312, %v294
  %328 = vst.msk [vmem:[%s3 + $0x3c] sm:$0xf] %vm312, %v295
  // Predicated region
  $region14: #{atari_feature_model.4} parent=0 // pred_check
    _
  $region15: #{atari_feature_model.4} parent=0 // pred_check_branch
    %330 = sbr.rel (0) target = $region17
  $region16: #{atari_feature_model.4} parent=0 // pred_region
    _
  $region17: #{atari_feature_model.4} parent=0 // pred_fallthru
    _
  // Predicated region
  $region18: #{atari_feature_model.4} parent=0 // pred_check
    _
  $region19: #{atari_feature_model.4} parent=0 // pred_check_branch
    %332 = sbr.rel (0) target = $region21
  $region20: #{atari_feature_model.4} parent=0 // pred_region
    _
  $region21: #{atari_feature_model.4} parent=0 // pred_fallthru
    _

// kernel: atari_feature_model.5
$region0: #{atari_feature_model.5}
  #allocation0 [shape = 'u32[]', space=smem, size = 0x4, offset = 0x4, fixed_abs, tag = 'smem constant byte address 0x4 - core index']
  #allocation1 [shape = 'u32[144,128]{1,0:T(1,128)}', space=vmem, size = 0x12000, scoped, tag = 'internal scratch']
  %s0 = inlined_call_operand.vmem [shape: bf16[24,512], index: 0, kind: input, shape index: {}]
  %s1 = inlined_call_operand.vmem [shape: bf16[512,64], index: 1, kind: input, shape index: {}]
  %s2 = inlined_call_operand.vmem [shape: f32[1,64], index: 2, kind: input, shape index: {}]
  %s3 = inlined_call_operand.vmem [shape: bf16[24,64], index: 3, kind: output, shape index: {}]
  %s4 = sld [smem:[#allocation0]]
  $region22: #{atari_feature_model.5} parent=0
    _
  %s6 = ssub.s32 1, %s4
  %s7 = scalar_select 0, %s6, %s4
  // Predicated region
  $region2: #{atari_feature_model.5} parent=0 // pred_check
    _
  $region3: #{atari_feature_model.5} parent=0 // pred_check_branch
    %9 = sbr.rel (0) target = $region5
  $region4: #{atari_feature_model.5} parent=0 // pred_region
    _
  $region5: #{atari_feature_model.5} parent=0 // pred_fallthru
    _
  // Predicated region
  $region6: #{atari_feature_model.5} parent=0 // pred_check
    _
  $region7: #{atari_feature_model.5} parent=0 // pred_check_branch
    %11 = sbr.rel (0) target = $region9
  $region8: #{atari_feature_model.5} parent=0 // pred_region
    _
  $region9: #{atari_feature_model.5} parent=0 // pred_fallthru
    _
  // Predicated region
  $region10: #{atari_feature_model.5} parent=0 // pred_check
    _
  $region11: #{atari_feature_model.5} parent=0 // pred_check_branch
    %13 = sbr.rel (0) target = $region13
  $region12: #{atari_feature_model.5} parent=0 // pred_region
    _
  $region13: #{atari_feature_model.5} parent=0 // pred_fallthru
    _
  %v15 = vld [vmem:[%s0] sm:$0xff]
  %v16 = vld [vmem:[%s0 + $0x8] sm:$0xff]
  %v17 = vld [vmem:[%s0 + $0x10] sm:$0xff]
  %v18 = vld [vmem:[%s0 + $0x18] sm:$0xff]
  %v19 = vld [vmem:[%s0 + $0x20] sm:$0xff]
  %v20 = vld [vmem:[%s0 + $0x28] sm:$0xff]
  %v21 = vld [vmem:[%s1] sm:$0xf]
  %v22 = vld [vmem:[%s1 + $0x4] sm:$0xf]
  %v23 = vld [vmem:[%s1 + $0x8] sm:$0xf]
  %v24 = vld [vmem:[%s1 + $0xc] sm:$0xf]
  %v25 = vld [vmem:[%s1 + $0x10] sm:$0xf]
  %v26 = vld [vmem:[%s1 + $0x14] sm:$0xf]
  %v27 = vld [vmem:[%s1 + $0x18] sm:$0xf]
  %v28 = vld [vmem:[%s1 + $0x1c] sm:$0xf]
  %v29 = vld [vmem:[%s1 + $0x20] sm:$0xf]
  %v30 = vld [vmem:[%s1 + $0x24] sm:$0xf]
  %v31 = vld [vmem:[%s1 + $0x28] sm:$0xf]
  %v32 = vld [vmem:[%s1 + $0x2c] sm:$0xf]
  %v33 = vld [vmem:[%s1 + $0x30] sm:$0xf]
  %v34 = vld [vmem:[%s1 + $0x34] sm:$0xf]
  %v35 = vld [vmem:[%s1 + $0x38] sm:$0xf]
  %v36 = vld [vmem:[%s1 + $0x3c] sm:$0xf]
  %v37 = vld [vmem:[%s1 + $0x40] sm:$0xf]
  %v38 = vld [vmem:[%s1 + $0x44] sm:$0xf]
  %v39 = vld [vmem:[%s1 + $0x48] sm:$0xf]
  %v40 = vld [vmem:[%s1 + $0x4c] sm:$0xf]
  %v41 = vld [vmem:[%s1 + $0x50] sm:$0xf]
  %v42 = vld [vmem:[%s1 + $0x54] sm:$0xf]
  %v43 = vld [vmem:[%s1 + $0x58] sm:$0xf]
  %v44 = vld [vmem:[%s1 + $0x5c] sm:$0xf]
  %v45 = vld [vmem:[%s1 + $0x60] sm:$0xf]
  %v46 = vld [vmem:[%s1 + $0x64] sm:$0xf]
  %v47 = vld [vmem:[%s1 + $0x68] sm:$0xf]
  %v48 = vld [vmem:[%s1 + $0x6c] sm:$0xf]
  %v49 = vld [vmem:[%s1 + $0x70] sm:$0xf]
  %v50 = vld [vmem:[%s1 + $0x74] sm:$0xf]
  %v51 = vld [vmem:[%s1 + $0x78] sm:$0xf]
  %v52 = vld [vmem:[%s1 + $0x7c] sm:$0xf]
  %v53 = vld [vmem:[%s1 + $0x80] sm:$0xf]
  %v54 = vld [vmem:[%s1 + $0x84] sm:$0xf]
  %v55 = vld [vmem:[%s1 + $0x88] sm:$0xf]
  %v56 = vld [vmem:[%s1 + $0x8c] sm:$0xf]
  %v57 = vld [vmem:[%s1 + $0x90] sm:$0xf]
  %v58 = vld [vmem:[%s1 + $0x94] sm:$0xf]
  %v59 = vld [vmem:[%s1 + $0x98] sm:$0xf]
  %v60 = vld [vmem:[%s1 + $0x9c] sm:$0xf]
  %v61 = vld [vmem:[%s1 + $0xa0] sm:$0xf]
  %v62 = vld [vmem:[%s1 + $0xa4] sm:$0xf]
  %v63 = vld [vmem:[%s1 + $0xa8] sm:$0xf]
  %v64 = vld [vmem:[%s1 + $0xac] sm:$0xf]
  %v65 = vld [vmem:[%s1 + $0xb0] sm:$0xf]
  %v66 = vld [vmem:[%s1 + $0xb4] sm:$0xf]
  %v67 = vld [vmem:[%s1 + $0xb8] sm:$0xf]
  %v68 = vld [vmem:[%s1 + $0xbc] sm:$0xf]
  %v69 = vld [vmem:[%s1 + $0xc0] sm:$0xf]
  %v70 = vld [vmem:[%s1 + $0xc4] sm:$0xf]
  %v71 = vld [vmem:[%s1 + $0xc8] sm:$0xf]
  %v72 = vld [vmem:[%s1 + $0xcc] sm:$0xf]
  %v73 = vld [vmem:[%s1 + $0xd0] sm:$0xf]
  %v74 = vld [vmem:[%s1 + $0xd4] sm:$0xf]
  %v75 = vld [vmem:[%s1 + $0xd8] sm:$0xf]
  %v76 = vld [vmem:[%s1 + $0xdc] sm:$0xf]
  %v77 = vld [vmem:[%s1 + $0xe0] sm:$0xf]
  %v78 = vld [vmem:[%s1 + $0xe4] sm:$0xf]
  %v79 = vld [vmem:[%s1 + $0xe8] sm:$0xf]
  %v80 = vld [vmem:[%s1 + $0xec] sm:$0xf]
  %v81 = vld [vmem:[%s1 + $0xf0] sm:$0xf]
  %v82 = vld [vmem:[%s1 + $0xf4] sm:$0xf]
  %v83 = vld [vmem:[%s1 + $0xf8] sm:$0xf]
  %v84 = vld [vmem:[%s1 + $0xfc] sm:$0xf]
  %v85 = vld [vmem:[%s2] sm:$0x1]
  %v87 = vlaneseq
  %v88 = vshrl.u32 %v87, 7
  %v89 = vsub.s32 0, %v88
  %v90 = vrot.slane %v85, %v89
  %v98 = vunpack.c.l.b16 %v15
  %v99 = vunpack.c.h.b16 %v15
  %v100 = vunpack.c.l.b16 %v16
  %v101 = vunpack.c.h.b16 %v16
  %v102 = vunpack.c.l.b16 %v17
  %v103 = vunpack.c.h.b16 %v17
  %v104 = vunpack.c.l.b16 %v18
  %v105 = vunpack.c.h.b16 %v18
  %v106 = vunpack.c.l.b16 %v19
  %v107 = vunpack.c.h.b16 %v19
  %v108 = vunpack.c.l.b16 %v20
  %v109 = vunpack.c.h.b16 %v20
  %v110 = vpack.c.b16 %v102, %v98
  %v111 = vpack.c.b16 %v103, %v99
  %v112 = vpack.c.b16 %v104, %v100
  %v113 = vpack.c.b16 %v105, %v101
  %v114 = vpack.c.b16 %v106, %v106
  %v115 = vpack.c.b16 %v107, %v107
  %v116 = vpack.c.b16 %v108, %v108
  %v117 = vpack.c.b16 %v109, %v109
  %v190 = vunpack.c.l.b16 %v21
  %v191 = vunpack.c.l.b16 %v22
  %v192 = vunpack.c.l.b16 %v23
  %v193 = vunpack.c.l.b16 %v24
  %v194 = vunpack.c.l.b16 %v25
  %v195 = vunpack.c.l.b16 %v26
  %v196 = vunpack.c.l.b16 %v27
  %v197 = vunpack.c.l.b16 %v28
  %v198 = vunpack.c.l.b16 %v29
  %v199 = vunpack.c.l.b16 %v30
  %v200 = vunpack.c.l.b16 %v31
  %v201 = vunpack.c.l.b16 %v32
  %v202 = vunpack.c.l.b16 %v33
  %v203 = vunpack.c.l.b16 %v34
  %v204 = vunpack.c.l.b16 %v35
  %v205 = vunpack.c.l.b16 %v36
  %v206 = vunpack.c.l.b16 %v37
  %v207 = vunpack.c.l.b16 %v38
  %v208 = vunpack.c.l.b16 %v39
  %v209 = vunpack.c.l.b16 %v40
  %v210 = vunpack.c.l.b16 %v41
  %v211 = vunpack.c.l.b16 %v42
  %v212 = vunpack.c.l.b16 %v43
  %v213 = vunpack.c.l.b16 %v44
  %v214 = vunpack.c.l.b16 %v45
  %v215 = vunpack.c.l.b16 %v46
  %v216 = vunpack.c.l.b16 %v47
  %v217 = vunpack.c.l.b16 %v48
  %v218 = vunpack.c.l.b16 %v49
  %v219 = vunpack.c.l.b16 %v50
  %v220 = vunpack.c.l.b16 %v51
  %v221 = vunpack.c.l.b16 %v52
  %v222 = vunpack.c.l.b16 %v53
  %v223 = vunpack.c.l.b16 %v54
  %v224 = vunpack.c.l.b16 %v55
  %v225 = vunpack.c.l.b16 %v56
  %v226 = vunpack.c.l.b16 %v57
  %v227 = vunpack.c.l.b16 %v58
  %v228 = vunpack.c.l.b16 %v59
  %v229 = vunpack.c.l.b16 %v60
  %v230 = vunpack.c.l.b16 %v61
  %v231 = vunpack.c.l.b16 %v62
  %v232 = vunpack.c.l.b16 %v63
  %v233 = vunpack.c.l.b16 %v64
  %v234 = vunpack.c.l.b16 %v65
  %v235 = vunpack.c.l.b16 %v66
  %v236 = vunpack.c.l.b16 %v67
  %v237 = vunpack.c.l.b16 %v68
  %v238 = vunpack.c.l.b16 %v69
  %v239 = vunpack.c.l.b16 %v70
  %v240 = vunpack.c.l.b16 %v71
  %v241 = vunpack.c.l.b16 %v72
  %v242 = vunpack.c.l.b16 %v73
  %v243 = vunpack.c.l.b16 %v74
  %v244 = vunpack.c.l.b16 %v75
  %v245 = vunpack.c.l.b16 %v76
  %v246 = vunpack.c.l.b16 %v77
  %v247 = vunpack.c.l.b16 %v78
  %v248 = vunpack.c.l.b16 %v79
  %v249 = vunpack.c.l.b16 %v80
  %v250 = vunpack.c.l.b16 %v81
  %v251 = vunpack.c.l.b16 %v82
  %v252 = vunpack.c.l.b16 %v83
  %v253 = vunpack.c.l.b16 %v84
  %v254 = vpack.c.b16 %v191, %v190
  %v255 = vpack.c.b16 %v193, %v192
  %v256 = vpack.c.b16 %v195, %v194
  %v257 = vpack.c.b16 %v197, %v196
  %v258 = vpack.c.b16 %v199, %v198
  %v259 = vpack.c.b16 %v201, %v200
  %v260 = vpack.c.b16 %v203, %v202
  %v261 = vpack.c.b16 %v205, %v204
  %v262 = vpack.c.b16 %v207, %v206
  %v263 = vpack.c.b16 %v209, %v208
  %v264 = vpack.c.b16 %v211, %v210
  %v265 = vpack.c.b16 %v213, %v212
  %v266 = vpack.c.b16 %v215, %v214
  %v267 = vpack.c.b16 %v217, %v216
  %v268 = vpack.c.b16 %v219, %v218
  %v269 = vpack.c.b16 %v221, %v220
  %v270 = vpack.c.b16 %v223, %v222
  %v271 = vpack.c.b16 %v225, %v224
  %v272 = vpack.c.b16 %v227, %v226
  %v273 = vpack.c.b16 %v229, %v228
  %v274 = vpack.c.b16 %v231, %v230
  %v275 = vpack.c.b16 %v233, %v232
  %v276 = vpack.c.b16 %v235, %v234
  %v277 = vpack.c.b16 %v237, %v236
  %v278 = vpack.c.b16 %v239, %v238
  %v279 = vpack.c.b16 %v241, %v240
  %v280 = vpack.c.b16 %v243, %v242
  %v281 = vpack.c.b16 %v245, %v244
  %v282 = vpack.c.b16 %v247, %v246
  %v283 = vpack.c.b16 %v249, %v248
  %v284 = vpack.c.b16 %v251, %v250
  %v285 = vpack.c.b16 %v253, %v252
  %318 = vmatprep.subr.bf16.mxu0 0
  %319 = vmatpush1.bf16.msra.mxu0 %v261
  %320 = vmatprep.subr.bf16.mxu0 0
  %321 = vmatpush1.bf16.msra.mxu0 %v260
  %322 = vmatprep.subr.bf16.mxu0 0
  %323 = vmatpush1.bf16.msra.mxu0 %v259
  %324 = vmatprep.subr.bf16.mxu0 0
  %325 = vmatpush1.bf16.msra.mxu0 %v258
  %326 = vmatprep.subr.bf16.mxu0 0
  %327 = vmatpush1.bf16.msra.mxu0 %v257
  %328 = vmatprep.subr.bf16.mxu0 0
  %329 = vmatpush1.bf16.msra.mxu0 %v256
  %330 = vmatprep.subr.bf16.mxu0 0
  %331 = vmatpush1.bf16.msra.mxu0 %v255
  %332 = vmatprep.subr.bf16.mxu0 0
  %333 = vmatpush1.bf16.msra.mxu0 %v254
  %334 = vmatprep.subr.bf16.mxu0 0
  %335 = vmatpush2.bf16.msra.mxu0 %v269
  %336 = vmatprep.subr.bf16.mxu0 0
  %337 = vmatpush2.bf16.msra.mxu0 %v268
  %338 = vmatprep.subr.bf16.mxu0 0
  %339 = vmatpush2.bf16.msra.mxu0 %v267
  %340 = vmatprep.subr.bf16.mxu0 0
  %341 = vmatpush2.bf16.msra.mxu0 %v266
  %342 = vmatprep.subr.bf16.mxu0 0
  %343 = vmatpush2.bf16.msra.mxu0 %v265
  %344 = vmatprep.subr.bf16.mxu0 0
  %345 = vmatpush2.bf16.msra.mxu0 %v264
  %346 = vmatprep.subr.bf16.mxu0 0
  %347 = vmatpush2.bf16.msra.mxu0 %v263
  %348 = vmatprep.subr.bf16.mxu0 0
  %349 = vmatpush2.bf16.msra.mxu0 %v262
  %350 = vmatprep.mubr.bf16.mxu0 %v111
  %351 = vmatmul.mubr.bf16.gmra.mxu0 %v110
  %v352 = vpop.f32.mrf.mxu0
  %v353 = vadd.f32 %v90, %v352
  %v354 = vpop.f32.mrf.mxu0
  %v355 = vpop.f32.mrf.mxu0
  %v356 = vadd.f32 %v90, %v355
  %v357 = vpop.f32.mrf.mxu0
  %358 = vmatprep.mubr.bf16.mxu0 %v115
  %359 = vmatmul.mubr.bf16.gmra.mxu0 %v114
  %v360 = vpop.f32.mrf.mxu0
  %v361 = vadd.f32 %v90, %v360
  %v362 = vpop.f32.mrf.mxu0
  %v363 = vpop.f32.mrf.mxu0
  %v364 = vpop.f32.mrf.mxu0
  %365 = vdwg.mxu0
  %366 = vmatprep.subr.bf16.mxu0 0
  %367 = vmatpush1.bf16.msra.mxu0 %v277
  %368 = vmatprep.subr.bf16.mxu0 0
  %369 = vmatpush1.bf16.msra.mxu0 %v276
  %370 = vmatprep.subr.bf16.mxu0 0
  %371 = vmatpush1.bf16.msra.mxu0 %v275
  %372 = vmatprep.subr.bf16.mxu0 0
  %373 = vmatpush1.bf16.msra.mxu0 %v274
  %374 = vmatprep.subr.bf16.mxu0 0
  %375 = vmatpush1.bf16.msra.mxu0 %v273
  %376 = vmatprep.subr.bf16.mxu0 0
  %377 = vmatpush1.bf16.msra.mxu0 %v272
  %378 = vmatprep.subr.bf16.mxu0 0
  %379 = vmatpush1.bf16.msra.mxu0 %v271
  %380 = vmatprep.subr.bf16.mxu0 0
  %381 = vmatpush1.bf16.msra.mxu0 %v270
  %382 = vmatprep.subr.bf16.mxu0 0
  %383 = vmatpush2.bf16.msra.mxu0 %v285
  %384 = vmatprep.subr.bf16.mxu0 0
  %385 = vmatpush2.bf16.msra.mxu0 %v284
  %386 = vmatprep.subr.bf16.mxu0 0
  %387 = vmatpush2.bf16.msra.mxu0 %v283
  %388 = vmatprep.subr.bf16.mxu0 0
  %389 = vmatpush2.bf16.msra.mxu0 %v282
  %390 = vmatprep.subr.bf16.mxu0 0
  %391 = vmatpush2.bf16.msra.mxu0 %v281
  %392 = vmatprep.subr.bf16.mxu0 0
  %393 = vmatpush2.bf16.msra.mxu0 %v280
  %394 = vmatprep.subr.bf16.mxu0 0
  %395 = vmatpush2.bf16.msra.mxu0 %v279
  %396 = vmatprep.subr.bf16.mxu0 0
  %397 = vmatpush2.bf16.msra.mxu0 %v278
  %398 = vmatprep.mubr.bf16.mxu0 %v113
  %399 = vmatmul.mubr.bf16.gmra.mxu0 %v112
  %v400 = vpop.f32.mrf.mxu0
  %v401 = vadd.f32 %v353, %v400
  %v402 = vpop.f32.mrf.mxu0
  %v403 = vpop.f32.mrf.mxu0
  %v404 = vadd.f32 %v356, %v403
  %v405 = vpop.f32.mrf.mxu0
  %406 = vmatprep.mubr.bf16.mxu0 %v117
  %407 = vmatmul.mubr.bf16.gmra.mxu0 %v116
  %v408 = vpop.f32.mrf.mxu0
  %v409 = vadd.f32 %v361, %v408
  %v410 = vpop.f32.mrf.mxu0
  %v411 = vpop.f32.mrf.mxu0
  %v412 = vpop.f32.mrf.mxu0
  %413 = vdwg.mxu0
  %v414 = vmax.f32 %v401, 0.0
  %v415 = vmax.f32 %v404, 0.0
  %v416 = vmax.f32 %v409, 0.0
  %v417 = vpack.c.bf16 %v415, %v414
  %v418 = vpack.c.bf16 %v416, %v416
  %v421 = vunpack.c.l.b16 %v417
  %v422 = vunpack.c.h.b16 %v417
  %v423 = vunpack.c.l.b16 %v418
  %v424 = vpack.c.b16 %v421, %v421
  %v425 = vpack.c.b16 %v422, %v422
  %v426 = vpack.c.b16 %v423, %v423
  %vm430 = vcmask 519168
  %431 = vst.msk [vmem:[%s3] sm:$0xf] %vm430, %v424
  %432 = vst.msk [vmem:[%s3 + $0x4] sm:$0xf] %vm430, %v425
  %433 = vst.msk [vmem:[%s3 + $0x8] sm:$0xf] %vm430, %v426
  // Predicated region
  $region14: #{atari_feature_model.5} parent=0 // pred_check
    _
  $region15: #{atari_feature_model.5} parent=0 // pred_check_branch
    %435 = sbr.rel (0) target = $region17
  $region16: #{atari_feature_model.5} parent=0 // pred_region
    _
  $region17: #{atari_feature_model.5} parent=0 // pred_fallthru
    _
  // Predicated region
  $region18: #{atari_feature_model.5} parent=0 // pred_check
    _
  $region19: #{atari_feature_model.5} parent=0 // pred_check_branch
    %437 = sbr.rel (0) target = $region21
  $region20: #{atari_feature_model.5} parent=0 // pred_region
    _
  $region21: #{atari_feature_model.5} parent=0 // pred_fallthru
    _

// kernel: atari_feature_model.6
$region0: #{atari_feature_model.6}
  #allocation0 [shape = 'u32[]', space=smem, size = 0x4, offset = 0x4, fixed_abs, tag = 'smem constant byte address 0x4 - core index']
  #allocation1 [shape = 'u32[144,128]{1,0:T(1,128)}', space=vmem, size = 0x12000, scoped, tag = 'internal scratch']
  %s0 = inlined_call_operand.vmem [shape: bf16[8,576], index: 0, kind: input, shape index: {}]
  %s1 = inlined_call_operand.vmem [shape: bf16[576,64], index: 1, kind: input, shape index: {}]
  %s2 = inlined_call_operand.vmem [shape: f32[1,64], index: 2, kind: input, shape index: {}]
  %s3 = inlined_call_operand.vmem [shape: bf16[8,64], index: 3, kind: output, shape index: {}]
  %s4 = sld [smem:[#allocation0]]
  $region22: #{atari_feature_model.6} parent=0
    _
  %s6 = ssub.s32 1, %s4
  %s7 = scalar_select 0, %s6, %s4
  // Predicated region
  $region2: #{atari_feature_model.6} parent=0 // pred_check
    _
  $region3: #{atari_feature_model.6} parent=0 // pred_check_branch
    %9 = sbr.rel (0) target = $region5
  $region4: #{atari_feature_model.6} parent=0 // pred_region
    _
  $region5: #{atari_feature_model.6} parent=0 // pred_fallthru
    _
  // Predicated region
  $region6: #{atari_feature_model.6} parent=0 // pred_check
    _
  $region7: #{atari_feature_model.6} parent=0 // pred_check_branch
    %11 = sbr.rel (0) target = $region9
  $region8: #{atari_feature_model.6} parent=0 // pred_region
    _
  $region9: #{atari_feature_model.6} parent=0 // pred_fallthru
    _
  // Predicated region
  $region10: #{atari_feature_model.6} parent=0 // pred_check
    _
  $region11: #{atari_feature_model.6} parent=0 // pred_check_branch
    %13 = sbr.rel (0) target = $region13
  $region12: #{atari_feature_model.6} parent=0 // pred_region
    _
  $region13: #{atari_feature_model.6} parent=0 // pred_fallthru
    _
  %v15 = vld [vmem:[%s0] sm:$0xff]
  %v16 = vld [vmem:[%s0 + $0x8] sm:$0xff]
  %v17 = vld [vmem:[%s0 + $0x10] sm:$0xf]
  %v18 = vld [vmem:[%s1] sm:$0xf]
  %v19 = vld [vmem:[%s1 + $0x4] sm:$0xf]
  %v20 = vld [vmem:[%s1 + $0x8] sm:$0xf]
  %v21 = vld [vmem:[%s1 + $0xc] sm:$0xf]
  %v22 = vld [vmem:[%s1 + $0x10] sm:$0xf]
  %v23 = vld [vmem:[%s1 + $0x14] sm:$0xf]
  %v24 = vld [vmem:[%s1 + $0x18] sm:$0xf]
  %v25 = vld [vmem:[%s1 + $0x1c] sm:$0xf]
  %v26 = vld [vmem:[%s1 + $0x20] sm:$0xf]
  %v27 = vld [vmem:[%s1 + $0x24] sm:$0xf]
  %v28 = vld [vmem:[%s1 + $0x28] sm:$0xf]
  %v29 = vld [vmem:[%s1 + $0x2c] sm:$0xf]
  %v30 = vld [vmem:[%s1 + $0x30] sm:$0xf]
  %v31 = vld [vmem:[%s1 + $0x34] sm:$0xf]
  %v32 = vld [vmem:[%s1 + $0x38] sm:$0xf]
  %v33 = vld [vmem:[%s1 + $0x3c] sm:$0xf]
  %v34 = vld [vmem:[%s1 + $0x40] sm:$0xf]
  %v35 = vld [vmem:[%s1 + $0x44] sm:$0xf]
  %v36 = vld [vmem:[%s1 + $0x48] sm:$0xf]
  %v37 = vld [vmem:[%s1 + $0x4c] sm:$0xf]
  %v38 = vld [vmem:[%s1 + $0x50] sm:$0xf]
  %v39 = vld [vmem:[%s1 + $0x54] sm:$0xf]
  %v40 = vld [vmem:[%s1 + $0x58] sm:$0xf]
  %v41 = vld [vmem:[%s1 + $0x5c] sm:$0xf]
  %v42 = vld [vmem:[%s1 + $0x60] sm:$0xf]
  %v43 = vld [vmem:[%s1 + $0x64] sm:$0xf]
  %v44 = vld [vmem:[%s1 + $0x68] sm:$0xf]
  %v45 = vld [vmem:[%s1 + $0x6c] sm:$0xf]
  %v46 = vld [vmem:[%s1 + $0x70] sm:$0xf]
  %v47 = vld [vmem:[%s1 + $0x74] sm:$0xf]
  %v48 = vld [vmem:[%s1 + $0x78] sm:$0xf]
  %v49 = vld [vmem:[%s1 + $0x7c] sm:$0xf]
  %v50 = vld [vmem:[%s1 + $0x80] sm:$0xf]
  %v51 = vld [vmem:[%s1 + $0x84] sm:$0xf]
  %v52 = vld [vmem:[%s1 + $0x88] sm:$0xf]
  %v53 = vld [vmem:[%s1 + $0x8c] sm:$0xf]
  %v54 = vld [vmem:[%s1 + $0x90] sm:$0xf]
  %v55 = vld [vmem:[%s1 + $0x94] sm:$0xf]
  %v56 = vld [vmem:[%s1 + $0x98] sm:$0xf]
  %v57 = vld [vmem:[%s1 + $0x9c] sm:$0xf]
  %v58 = vld [vmem:[%s1 + $0xa0] sm:$0xf]
  %v59 = vld [vmem:[%s1 + $0xa4] sm:$0xf]
  %v60 = vld [vmem:[%s1 + $0xa8] sm:$0xf]
  %v61 = vld [vmem:[%s1 + $0xac] sm:$0xf]
  %v62 = vld [vmem:[%s1 + $0xb0] sm:$0xf]
  %v63 = vld [vmem:[%s1 + $0xb4] sm:$0xf]
  %v64 = vld [vmem:[%s1 + $0xb8] sm:$0xf]
  %v65 = vld [vmem:[%s1 + $0xbc] sm:$0xf]
  %v66 = vld [vmem:[%s1 + $0xc0] sm:$0xf]
  %v67 = vld [vmem:[%s1 + $0xc4] sm:$0xf]
  %v68 = vld [vmem:[%s1 + $0xc8] sm:$0xf]
  %v69 = vld [vmem:[%s1 + $0xcc] sm:$0xf]
  %v70 = vld [vmem:[%s1 + $0xd0] sm:$0xf]
  %v71 = vld [vmem:[%s1 + $0xd4] sm:$0xf]
  %v72 = vld [vmem:[%s1 + $0xd8] sm:$0xf]
  %v73 = vld [vmem:[%s1 + $0xdc] sm:$0xf]
  %v74 = vld [vmem:[%s1 + $0xe0] sm:$0xf]
  %v75 = vld [vmem:[%s1 + $0xe4] sm:$0xf]
  %v76 = vld [vmem:[%s1 + $0xe8] sm:$0xf]
  %v77 = vld [vmem:[%s1 + $0xec] sm:$0xf]
  %v78 = vld [vmem:[%s1 + $0xf0] sm:$0xf]
  %v79 = vld [vmem:[%s1 + $0xf4] sm:$0xf]
  %v80 = vld [vmem:[%s1 + $0xf8] sm:$0xf]
  %v81 = vld [vmem:[%s1 + $0xfc] sm:$0xf]
  %v82 = vld [vmem:[%s1 + $0x100] sm:$0xf]
  %v83 = vld [vmem:[%s1 + $0x104] sm:$0xf]
  %v84 = vld [vmem:[%s1 + $0x108] sm:$0xf]
  %v85 = vld [vmem:[%s1 + $0x10c] sm:$0xf]
  %v86 = vld [vmem:[%s1 + $0x110] sm:$0xf]
  %v87 = vld [vmem:[%s1 + $0x114] sm:$0xf]
  %v88 = vld [vmem:[%s1 + $0x118] sm:$0xf]
  %v89 = vld [vmem:[%s1 + $0x11c] sm:$0xf]
  %v90 = vld [vmem:[%s2] sm:$0x1]
  %v92 = vlaneseq
  %v93 = vshrl.u32 %v92, 7
  %v94 = vsub.s32 0, %v93
  %v95 = vrot.slane %v90, %v94
  %v100 = vunpack.c.l.b16 %v15
  %v101 = vunpack.c.h.b16 %v15
  %v102 = vunpack.c.l.b16 %v16
  %v103 = vunpack.c.h.b16 %v16
  %v104 = vunpack.c.l.b16 %v17
  %v105 = vpack.c.b16 %v100, %v100
  %v106 = vpack.c.b16 %v101, %v101
  %v107 = vpack.c.b16 %v102, %v102
  %v108 = vpack.c.b16 %v103, %v103
  %v109 = vpack.c.b16 %v104, %v104
  %v186 = vunpack.c.l.b16 %v18
  %v187 = vunpack.c.l.b16 %v19
  %v188 = vunpack.c.l.b16 %v20
  %v189 = vunpack.c.l.b16 %v21
  %v190 = vunpack.c.l.b16 %v22
  %v191 = vunpack.c.l.b16 %v23
  %v192 = vunpack.c.l.b16 %v24
  %v193 = vunpack.c.l.b16 %v25
  %v194 = vunpack.c.l.b16 %v26
  %v195 = vunpack.c.l.b16 %v27
  %v196 = vunpack.c.l.b16 %v28
  %v197 = vunpack.c.l.b16 %v29
  %v198 = vunpack.c.l.b16 %v30
  %v199 = vunpack.c.l.b16 %v31
  %v200 = vunpack.c.l.b16 %v32
  %v201 = vunpack.c.l.b16 %v33
  %v202 = vunpack.c.l.b16 %v34
  %v203 = vunpack.c.l.b16 %v35
  %v204 = vunpack.c.l.b16 %v36
  %v205 = vunpack.c.l.b16 %v37
  %v206 = vunpack.c.l.b16 %v38
  %v207 = vunpack.c.l.b16 %v39
  %v208 = vunpack.c.l.b16 %v40
  %v209 = vunpack.c.l.b16 %v41
  %v210 = vunpack.c.l.b16 %v42
  %v211 = vunpack.c.l.b16 %v43
  %v212 = vunpack.c.l.b16 %v44
  %v213 = vunpack.c.l.b16 %v45
  %v214 = vunpack.c.l.b16 %v46
  %v215 = vunpack.c.l.b16 %v47
  %v216 = vunpack.c.l.b16 %v48
  %v217 = vunpack.c.l.b16 %v49
  %v218 = vunpack.c.l.b16 %v50
  %v219 = vunpack.c.l.b16 %v51
  %v220 = vunpack.c.l.b16 %v52
  %v221 = vunpack.c.l.b16 %v53
  %v222 = vunpack.c.l.b16 %v54
  %v223 = vunpack.c.l.b16 %v55
  %v224 = vunpack.c.l.b16 %v56
  %v225 = vunpack.c.l.b16 %v57
  %v226 = vunpack.c.l.b16 %v58
  %v227 = vunpack.c.l.b16 %v59
  %v228 = vunpack.c.l.b16 %v60
  %v229 = vunpack.c.l.b16 %v61
  %v230 = vunpack.c.l.b16 %v62
  %v231 = vunpack.c.l.b16 %v63
  %v232 = vunpack.c.l.b16 %v64
  %v233 = vunpack.c.l.b16 %v65
  %v234 = vunpack.c.l.b16 %v66
  %v235 = vunpack.c.l.b16 %v67
  %v236 = vunpack.c.l.b16 %v68
  %v237 = vunpack.c.l.b16 %v69
  %v238 = vunpack.c.l.b16 %v70
  %v239 = vunpack.c.l.b16 %v71
  %v240 = vunpack.c.l.b16 %v72
  %v241 = vunpack.c.l.b16 %v73
  %v242 = vunpack.c.l.b16 %v74
  %v243 = vunpack.c.l.b16 %v75
  %v244 = vunpack.c.l.b16 %v76
  %v245 = vunpack.c.l.b16 %v77
  %v246 = vunpack.c.l.b16 %v78
  %v247 = vunpack.c.l.b16 %v79
  %v248 = vunpack.c.l.b16 %v80
  %v249 = vunpack.c.l.b16 %v81
  %v250 = vunpack.c.l.b16 %v82
  %v251 = vunpack.c.l.b16 %v83
  %v252 = vunpack.c.l.b16 %v84
  %v253 = vunpack.c.l.b16 %v85
  %v254 = vunpack.c.l.b16 %v86
  %v255 = vunpack.c.l.b16 %v87
  %v256 = vunpack.c.l.b16 %v88
  %v257 = vunpack.c.l.b16 %v89
  %v258 = vpack.c.b16 %v187, %v186
  %v259 = vpack.c.b16 %v189, %v188
  %v260 = vpack.c.b16 %v191, %v190
  %v261 = vpack.c.b16 %v193, %v192
  %v262 = vpack.c.b16 %v195, %v194
  %v263 = vpack.c.b16 %v197, %v196
  %v264 = vpack.c.b16 %v199, %v198
  %v265 = vpack.c.b16 %v201, %v200
  %v266 = vpack.c.b16 %v203, %v202
  %v267 = vpack.c.b16 %v205, %v204
  %v268 = vpack.c.b16 %v207, %v206
  %v269 = vpack.c.b16 %v209, %v208
  %v270 = vpack.c.b16 %v211, %v210
  %v271 = vpack.c.b16 %v213, %v212
  %v272 = vpack.c.b16 %v215, %v214
  %v273 = vpack.c.b16 %v217, %v216
  %v274 = vpack.c.b16 %v219, %v218
  %v275 = vpack.c.b16 %v221, %v220
  %v276 = vpack.c.b16 %v223, %v222
  %v277 = vpack.c.b16 %v225, %v224
  %v278 = vpack.c.b16 %v227, %v226
  %v279 = vpack.c.b16 %v229, %v228
  %v280 = vpack.c.b16 %v231, %v230
  %v281 = vpack.c.b16 %v233, %v232
  %v282 = vpack.c.b16 %v235, %v234
  %v283 = vpack.c.b16 %v237, %v236
  %v284 = vpack.c.b16 %v239, %v238
  %v285 = vpack.c.b16 %v241, %v240
  %v286 = vpack.c.b16 %v243, %v242
  %v287 = vpack.c.b16 %v245, %v244
  %v288 = vpack.c.b16 %v247, %v246
  %v289 = vpack.c.b16 %v249, %v248
  %v290 = vpack.c.b16 %v251, %v250
  %v291 = vpack.c.b16 %v253, %v252
  %v292 = vpack.c.b16 %v255, %v254
  %v293 = vpack.c.b16 %v257, %v256
  %vm330 = vcmask 523264
  %v332 = vsel %vm330, %v109, 0
  %334 = vmatprep.subr.bf16.mxu0 0
  %335 = vmatpush1.bf16.msra.mxu0 %v265
  %336 = vmatprep.subr.bf16.mxu0 0
  %337 = vmatpush1.bf16.msra.mxu0 %v264
  %338 = vmatprep.subr.bf16.mxu0 0
  %339 = vmatpush1.bf16.msra.mxu0 %v263
  %340 = vmatprep.subr.bf16.mxu0 0
  %341 = vmatpush1.bf16.msra.mxu0 %v262
  %342 = vmatprep.subr.bf16.mxu0 0
  %343 = vmatpush1.bf16.msra.mxu0 %v261
  %344 = vmatprep.subr.bf16.mxu0 0
  %345 = vmatpush1.bf16.msra.mxu0 %v260
  %346 = vmatprep.subr.bf16.mxu0 0
  %347 = vmatpush1.bf16.msra.mxu0 %v259
  %348 = vmatprep.subr.bf16.mxu0 0
  %349 = vmatpush1.bf16.msra.mxu0 %v258
  %350 = vmatprep.subr.bf16.mxu0 0
  %351 = vmatpush2.bf16.msra.mxu0 %v273
  %352 = vmatprep.subr.bf16.mxu0 0
  %353 = vmatpush2.bf16.msra.mxu0 %v272
  %354 = vmatprep.subr.bf16.mxu0 0
  %355 = vmatpush2.bf16.msra.mxu0 %v271
  %356 = vmatprep.subr.bf16.mxu0 0
  %357 = vmatpush2.bf16.msra.mxu0 %v270
  %358 = vmatprep.subr.bf16.mxu0 0
  %359 = vmatpush2.bf16.msra.mxu0 %v269
  %360 = vmatprep.subr.bf16.mxu0 0
  %361 = vmatpush2.bf16.msra.mxu0 %v268
  %362 = vmatprep.subr.bf16.mxu0 0
  %363 = vmatpush2.bf16.msra.mxu0 %v267
  %364 = vmatprep.subr.bf16.mxu0 0
  %365 = vmatpush2.bf16.msra.mxu0 %v266
  %366 = vmatprep.mubr.bf16.mxu0 %v106
  %367 = vmatmul.mubr.bf16.gmra.mxu0 %v105
  %v368 = vpop.f32.mrf.mxu0
  %v369 = vadd.f32 %v95, %v368
  %v370 = vpop.f32.mrf.mxu0
  %v371 = vpop.f32.mrf.mxu0
  %v372 = vpop.f32.mrf.mxu0
  %373 = vdwg.mxu0
  %374 = vmatprep.subr.bf16.mxu0 0
  %375 = vmatpush1.bf16.msra.mxu0 %v281
  %376 = vmatprep.subr.bf16.mxu0 0
  %377 = vmatpush1.bf16.msra.mxu0 %v280
  %378 = vmatprep.subr.bf16.mxu0 0
  %379 = vmatpush1.bf16.msra.mxu0 %v279
  %380 = vmatprep.subr.bf16.mxu0 0
  %381 = vmatpush1.bf16.msra.mxu0 %v278
  %382 = vmatprep.subr.bf16.mxu0 0
  %383 = vmatpush1.bf16.msra.mxu0 %v277
  %384 = vmatprep.subr.bf16.mxu0 0
  %385 = vmatpush1.bf16.msra.mxu0 %v276
  %386 = vmatprep.subr.bf16.mxu0 0
  %387 = vmatpush1.bf16.msra.mxu0 %v275
  %388 = vmatprep.subr.bf16.mxu0 0
  %389 = vmatpush1.bf16.msra.mxu0 %v274
  %390 = vmatprep.subr.bf16.mxu0 0
  %391 = vmatpush2.bf16.msra.mxu0 %v289
  %392 = vmatprep.subr.bf16.mxu0 0
  %393 = vmatpush2.bf16.msra.mxu0 %v288
  %394 = vmatprep.subr.bf16.mxu0 0
  %395 = vmatpush2.bf16.msra.mxu0 %v287
  %396 = vmatprep.subr.bf16.mxu0 0
  %397 = vmatpush2.bf16.msra.mxu0 %v286
  %398 = vmatprep.subr.bf16.mxu0 0
  %399 = vmatpush2.bf16.msra.mxu0 %v285
  %400 = vmatprep.subr.bf16.mxu0 0
  %401 = vmatpush2.bf16.msra.mxu0 %v284
  %402 = vmatprep.subr.bf16.mxu0 0
  %403 = vmatpush2.bf16.msra.mxu0 %v283
  %404 = vmatprep.subr.bf16.mxu0 0
  %405 = vmatpush2.bf16.msra.mxu0 %v282
  %406 = vmatprep.mubr.bf16.mxu0 %v108
  %407 = vmatmul.mubr.bf16.gmra.mxu0 %v107
  %v408 = vpop.f32.mrf.mxu0
  %v409 = vadd.f32 %v369, %v408
  %v410 = vpop.f32.mrf.mxu0
  %v411 = vpop.f32.mrf.mxu0
  %v412 = vpop.f32.mrf.mxu0
  %413 = vdwg.mxu0
  %414 = vmatprep.subr.bf16.mxu0 0
  %415 = vmatpush1.bf16.msra.mxu0 0
  %416 = vmatprep.subr.bf16.mxu0 0
  %417 = vmatpush1.bf16.msra.mxu0 0
  %418 = vmatprep.subr.bf16.mxu0 0
  %419 = vmatpush1.bf16.msra.mxu0 0
  %420 = vmatprep.subr.bf16.mxu0 0
  %421 = vmatpush1.bf16.msra.mxu0 0
  %422 = vmatprep.subr.bf16.mxu0 0
  %423 = vmatpush1.bf16.msra.mxu0 %v293
  %424 = vmatprep.subr.bf16.mxu0 0
  %425 = vmatpush1.bf16.msra.mxu0 %v292
  %426 = vmatprep.subr.bf16.mxu0 0
  %427 = vmatpush1.bf16.msra.mxu0 %v291
  %428 = vmatprep.subr.bf16.mxu0 0
  %429 = vmatpush1.bf16.msra.mxu0 %v290
  %430 = vmatprep.subr.bf16.mxu0 0
  %431 = vmatpush2.bf16.msra.mxu0 0
  %432 = vmatprep.subr.bf16.mxu0 0
  %433 = vmatpush2.bf16.msra.mxu0 0
  %434 = vmatprep.subr.bf16.mxu0 0
  %435 = vmatpush2.bf16.msra.mxu0 0
  %436 = vmatprep.subr.bf16.mxu0 0
  %437 = vmatpush2.bf16.msra.mxu0 0
  %438 = vmatprep.subr.bf16.mxu0 0
  %439 = vmatpush2.bf16.msra.mxu0 0
  %440 = vmatprep.subr.bf16.mxu0 0
  %441 = vmatpush2.bf16.msra.mxu0 0
  %442 = vmatprep.subr.bf16.mxu0 0
  %443 = vmatpush2.bf16.msra.mxu0 0
  %444 = vmatprep.subr.bf16.mxu0 0
  %445 = vmatpush2.bf16.msra.mxu0 0
  %446 = vmatprep.mubr.bf16.mxu0 0
  %447 = vmatmul.mubr.bf16.gmra.mxu0 %v332
  %v448 = vpop.f32.mrf.mxu0
  %v449 = vadd.f32 %v409, %v448
  %v450 = vpop.f32.mrf.mxu0
  %v451 = vpop.f32.mrf.mxu0
  %v452 = vpop.f32.mrf.mxu0
  %453 = vdwg.mxu0
  %v454 = vmax.f32 %v449, 0.0
  %v455 = vpack.c.bf16 %v454, %v454
  %vm456 = vcmask 519168
  %457 = vst.msk [vmem:[%s3] sm:$0xf] %vm456, %v455
  // Predicated region
  $region14: #{atari_feature_model.6} parent=0 // pred_check
    _
  $region15: #{atari_feature_model.6} parent=0 // pred_check_branch
    %459 = sbr.rel (0) target = $region17
  $region16: #{atari_feature_model.6} parent=0 // pred_region
    _
  $region17: #{atari_feature_model.6} parent=0 // pred_fallthru
    _
  // Predicated region
  $region18: #{atari_feature_model.6} parent=0 // pred_check
    _
  $region19: #{atari_feature_model.6} parent=0 // pred_check_branch
    %461 = sbr.rel (0) target = $region21
  $region20: #{atari_feature_model.6} parent=0 // pred_region
    _
  $region21: #{atari_feature_model.6} parent=0 // pred_fallthru
    _

// kernel: atari_feature_model.7
$region0: #{atari_feature_model.7}
  #allocation0 [shape = 'u32[]', space=smem, size = 0x4, offset = 0x4, fixed_abs, tag = 'smem constant byte address 0x4 - core index']
  #allocation1 [shape = 'u32[144,128]{1,0:T(1,128)}', space=vmem, size = 0x12000, scoped, tag = 'internal scratch']
  %s0 = inlined_call_operand.vmem [shape: bf16[8,64], index: 0, kind: input, shape index: {}]
  %s1 = inlined_call_operand.vmem [shape: bf16[64,512], index: 1, kind: input, shape index: {}]
  %s2 = inlined_call_operand.vmem [shape: f32[1,512], index: 2, kind: input, shape index: {}]
  %s3 = inlined_call_operand.vmem [shape: bf16[512,512], index: 3, kind: input, shape index: {}]
  %s4 = inlined_call_operand.vmem [shape: f32[1,512], index: 4, kind: input, shape index: {}]
  %s5 = inlined_call_operand.vmem [shape: f32[8,512], index: 5, kind: output, shape index: {}]
  %s6 = sld [smem:[#allocation0]]
  $region30: #{atari_feature_model.7} parent=0
    _
  %s8 = ssub.s32 1, %s6
  %s9 = scalar_select 0, %s8, %s6
  // Predicated region
  $region2: #{atari_feature_model.7} parent=0 // pred_check
    _
  $region3: #{atari_feature_model.7} parent=0 // pred_check_branch
    %11 = sbr.rel (0) target = $region5
  $region4: #{atari_feature_model.7} parent=0 // pred_region
    _
  $region5: #{atari_feature_model.7} parent=0 // pred_fallthru
    _
  // Predicated region
  $region6: #{atari_feature_model.7} parent=0 // pred_check
    _
  $region7: #{atari_feature_model.7} parent=0 // pred_check_branch
    %13 = sbr.rel (0) target = $region9
  $region8: #{atari_feature_model.7} parent=0 // pred_region
    _
  $region9: #{atari_feature_model.7} parent=0 // pred_fallthru
    _
  // Predicated region
  $region10: #{atari_feature_model.7} parent=0 // pred_check
    _
  $region11: #{atari_feature_model.7} parent=0 // pred_check_branch
    %15 = sbr.rel (0) target = $region13
  $region12: #{atari_feature_model.7} parent=0 // pred_region
    _
  $region13: #{atari_feature_model.7} parent=0 // pred_fallthru
    _
  // Predicated region
  $region14: #{atari_feature_model.7} parent=0 // pred_check
    _
  $region15: #{atari_feature_model.7} parent=0 // pred_check_branch
    %17 = sbr.rel (0) target = $region17
  $region16: #{atari_feature_model.7} parent=0 // pred_region
    _
  $region17: #{atari_feature_model.7} parent=0 // pred_fallthru
    _
  // Predicated region
  $region18: #{atari_feature_model.7} parent=0 // pred_check
    _
  $region19: #{atari_feature_model.7} parent=0 // pred_check_branch
    %19 = sbr.rel (0) target = $region21
  $region20: #{atari_feature_model.7} parent=0 // pred_region
    _
  $region21: #{atari_feature_model.7} parent=0 // pred_fallthru
    _
  %v21 = vld [vmem:[%s0] sm:$0xf]
  %v22 = vld [vmem:[%s1] sm:$0xff]
  %v23 = vld [vmem:[%s1 + $0x8] sm:$0xff]
  %v24 = vld [vmem:[%s1 + $0x10] sm:$0xff]
  %v25 = vld [vmem:[%s1 + $0x18] sm:$0xff]
  %v26 = vld [vmem:[%s1 + $0x20] sm:$0xff]
  %v27 = vld [vmem:[%s1 + $0x28] sm:$0xff]
  %v28 = vld [vmem:[%s1 + $0x30] sm:$0xff]
  %v29 = vld [vmem:[%s1 + $0x38] sm:$0xff]
  %v30 = vld [vmem:[%s1 + $0x40] sm:$0xff]
  %v31 = vld [vmem:[%s1 + $0x48] sm:$0xff]
  %v32 = vld [vmem:[%s1 + $0x50] sm:$0xff]
  %v33 = vld [vmem:[%s1 + $0x58] sm:$0xff]
  %v34 = vld [vmem:[%s1 + $0x60] sm:$0xff]
  %v35 = vld [vmem:[%s1 + $0x68] sm:$0xff]
  %v36 = vld [vmem:[%s1 + $0x70] sm:$0xff]
  %v37 = vld [vmem:[%s1 + $0x78] sm:$0xff]
  %v38 = vld [vmem:[%s2] sm:$0xf]
  %v40 = vlaneseq
  %v41 = vshrl.u32 %v40, 7
  %v42 = vsub.s32 0, %v41
  %v43 = vrot.slane %v38, %v42
  %v44 = vlaneseq
  %v45 = vshrl.u32 %v44, 7
  %v46 = vsub.s32 1, %v45
  %v47 = vrot.slane %v38, %v46
  %v48 = vlaneseq
  %v49 = vshrl.u32 %v48, 7
  %v50 = vsub.s32 2, %v49
  %v51 = vrot.slane %v38, %v50
  %v52 = vlaneseq
  %v53 = vshrl.u32 %v52, 7
  %v54 = vsub.s32 3, %v53
  %v55 = vrot.slane %v38, %v54
  %v76 = vunpack.c.l.b16 %v22
  %v77 = vunpack.c.h.b16 %v22
  %v78 = vunpack.c.l.b16 %v23
  %v79 = vunpack.c.h.b16 %v23
  %v80 = vunpack.c.l.b16 %v24
  %v81 = vunpack.c.h.b16 %v24
  %v82 = vunpack.c.l.b16 %v25
  %v83 = vunpack.c.h.b16 %v25
  %v84 = vunpack.c.l.b16 %v26
  %v85 = vunpack.c.h.b16 %v26
  %v86 = vunpack.c.l.b16 %v27
  %v87 = vunpack.c.h.b16 %v27
  %v88 = vunpack.c.l.b16 %v28
  %v89 = vunpack.c.h.b16 %v28
  %v90 = vunpack.c.l.b16 %v29
  %v91 = vunpack.c.h.b16 %v29
  %v92 = vunpack.c.l.b16 %v30
  %v93 = vunpack.c.h.b16 %v30
  %v94 = vunpack.c.l.b16 %v31
  %v95 = vunpack.c.h.b16 %v31
  %v96 = vunpack.c.l.b16 %v32
  %v97 = vunpack.c.h.b16 %v32
  %v98 = vunpack.c.l.b16 %v33
  %v99 = vunpack.c.h.b16 %v33
  %v100 = vunpack.c.l.b16 %v34
  %v101 = vunpack.c.h.b16 %v34
  %v102 = vunpack.c.l.b16 %v35
  %v103 = vunpack.c.h.b16 %v35
  %v104 = vunpack.c.l.b16 %v36
  %v105 = vunpack.c.h.b16 %v36
  %v106 = vunpack.c.l.b16 %v37
  %v107 = vunpack.c.h.b16 %v37
  %v108 = vpack.c.b16 %v80, %v76
  %v109 = vpack.c.b16 %v81, %v77
  %v110 = vpack.c.b16 %v82, %v78
  %v111 = vpack.c.b16 %v83, %v79
  %v112 = vpack.c.b16 %v88, %v84
  %v113 = vpack.c.b16 %v89, %v85
  %v114 = vpack.c.b16 %v90, %v86
  %v115 = vpack.c.b16 %v91, %v87
  %v116 = vpack.c.b16 %v96, %v92
  %v117 = vpack.c.b16 %v97, %v93
  %v118 = vpack.c.b16 %v98, %v94
  %v119 = vpack.c.b16 %v99, %v95
  %v120 = vpack.c.b16 %v104, %v100
  %v121 = vpack.c.b16 %v105, %v101
  %v122 = vpack.c.b16 %v106, %v102
  %v123 = vpack.c.b16 %v107, %v103
  %vm140 = vcmask 523264
  %v142 = vsel %vm140, %v21, 0
  %144 = vmatprep.subr.bf16.mxu0 0
  %145 = vmatpush1.bf16.msra.mxu0 0
  %146 = vmatprep.subr.bf16.mxu0 0
  %147 = vmatpush1.bf16.msra.mxu0 0
  %148 = vmatprep.subr.bf16.mxu0 0
  %149 = vmatpush1.bf16.msra.mxu0 0
  %150 = vmatprep.subr.bf16.mxu0 0
  %151 = vmatpush1.bf16.msra.mxu0 0
  %152 = vmatprep.subr.bf16.mxu0 %v121
  %153 = vmatpush1.bf16.msra.mxu0 %v120
  %154 = vmatprep.subr.bf16.mxu0 %v117
  %155 = vmatpush1.bf16.msra.mxu0 %v116
  %156 = vmatprep.subr.bf16.mxu0 %v113
  %157 = vmatpush1.bf16.msra.mxu0 %v112
  %158 = vmatprep.subr.bf16.mxu0 %v109
  %159 = vmatpush1.bf16.msra.mxu0 %v108
  %160 = vmatprep.subr.bf16.mxu0 0
  %161 = vmatpush2.bf16.msra.mxu0 0
  %162 = vmatprep.subr.bf16.mxu0 0
  %163 = vmatpush2.bf16.msra.mxu0 0
  %164 = vmatprep.subr.bf16.mxu0 0
  %165 = vmatpush2.bf16.msra.mxu0 0
  %166 = vmatprep.subr.bf16.mxu0 0
  %167 = vmatpush2.bf16.msra.mxu0 0
  %168 = vmatprep.subr.bf16.mxu0 0
  %169 = vmatpush2.bf16.msra.mxu0 0
  %170 = vmatprep.subr.bf16.mxu0 0
  %171 = vmatpush2.bf16.msra.mxu0 0
  %172 = vmatprep.subr.bf16.mxu0 0
  %173 = vmatpush2.bf16.msra.mxu0 0
  %174 = vmatprep.subr.bf16.mxu0 0
  %175 = vmatpush2.bf16.msra.mxu0 0
  %176 = vmatprep.mubr.bf16.mxu0 0
  %177 = vmatmul.mubr.bf16.gmra.mxu0 %v142
  %v178 = vpop.f32.mrf.mxu0
  %v179 = vadd.f32 %v43, %v178
  %v180 = vpop.f32.mrf.mxu0
  %v181 = vadd.f32 %v47, %v180
  %v182 = vpop.f32.mrf.mxu0
  %v183 = vpop.f32.mrf.mxu0
  %184 = vdwg.mxu0
  %185 = vmatprep.subr.bf16.mxu0 0
  %186 = vmatpush1.bf16.msra.mxu0 0
  %187 = vmatprep.subr.bf16.mxu0 0
  %188 = vmatpush1.bf16.msra.mxu0 0
  %189 = vmatprep.subr.bf16.mxu0 0
  %190 = vmatpush1.bf16.msra.mxu0 0
  %191 = vmatprep.subr.bf16.mxu0 0
  %192 = vmatpush1.bf16.msra.mxu0 0
  %193 = vmatprep.subr.bf16.mxu0 %v123
  %194 = vmatpush1.bf16.msra.mxu0 %v122
  %195 = vmatprep.subr.bf16.mxu0 %v119
  %196 = vmatpush1.bf16.msra.mxu0 %v118
  %197 = vmatprep.subr.bf16.mxu0 %v115
  %198 = vmatpush1.bf16.msra.mxu0 %v114
  %199 = vmatprep.subr.bf16.mxu0 %v111
  %200 = vmatpush1.bf16.msra.mxu0 %v110
  %201 = vmatprep.subr.bf16.mxu0 0
  %202 = vmatpush2.bf16.msra.mxu0 0
  %203 = vmatprep.subr.bf16.mxu0 0
  %204 = vmatpush2.bf16.msra.mxu0 0
  %205 = vmatprep.subr.bf16.mxu0 0
  %206 = vmatpush2.bf16.msra.mxu0 0
  %207 = vmatprep.subr.bf16.mxu0 0
  %208 = vmatpush2.bf16.msra.mxu0 0
  %209 = vmatprep.subr.bf16.mxu0 0
  %210 = vmatpush2.bf16.msra.mxu0 0
  %211 = vmatprep.subr.bf16.mxu0 0
  %212 = vmatpush2.bf16.msra.mxu0 0
  %213 = vmatprep.subr.bf16.mxu0 0
  %214 = vmatpush2.bf16.msra.mxu0 0
  %215 = vmatprep.subr.bf16.mxu0 0
  %216 = vmatpush2.bf16.msra.mxu0 0
  %217 = vmatprep.mubr.bf16.mxu0 0
  %218 = vmatmul.mubr.bf16.gmra.mxu0 %v142
  %v219 = vpop.f32.mrf.mxu0
  %v220 = vadd.f32 %v51, %v219
  %v221 = vpop.f32.mrf.mxu0
  %v222 = vadd.f32 %v55, %v221
  %v223 = vpop.f32.mrf.mxu0
  %v224 = vpop.f32.mrf.mxu0
  %225 = vdwg.mxu0
  %v226 = vmax.f32 %v179, 0.0
  %v227 = vmax.f32 %v181, 0.0
  %v228 = vmax.f32 %v220, 0.0
  %v229 = vmax.f32 %v222, 0.0
  %v230 = vpack.c.bf16 %v226, %v226
  %v231 = vpack.c.bf16 %v227, %v227
  %v232 = vpack.c.bf16 %v228, %v228
  %v233 = vpack.c.bf16 %v229, %v229
  %v234 = vld [vmem:[%s3] sm:$0xff]
  %v235 = vld [vmem:[%s3 + $0x8] sm:$0xff]
  %v236 = vld [vmem:[%s3 + $0x10] sm:$0xff]
  %v237 = vld [vmem:[%s3 + $0x18] sm:$0xff]
  %v238 = vld [vmem:[%s3 + $0x20] sm:$0xff]
  %v239 = vld [vmem:[%s3 + $0x28] sm:$0xff]
  %v240 = vld [vmem:[%s3 + $0x30] sm:$0xff]
  %v241 = vld [vmem:[%s3 + $0x38] sm:$0xff]
  %v242 = vld [vmem:[%s3 + $0x40] sm:$0xff]
  %v243 = vld [vmem:[%s3 + $0x48] sm:$0xff]
  %v244 = vld [vmem:[%s3 + $0x50] sm:$0xff]
  %v245 = vld [vmem:[%s3 + $0x58] sm:$0xff]
  %v246 = vld [vmem:[%s3 + $0x60] sm:$0xff]
  %v247 = vld [vmem:[%s3 + $0x68] sm:$0xff]
  %v248 = vld [vmem:[%s3 + $0x70] sm:$0xff]
  %v249 = vld [vmem:[%s3 + $0x78] sm:$0xff]
  %v250 = vld [vmem:[%s3 + $0x80] sm:$0xff]
  %v251 = vld [vmem:[%s3 + $0x88] sm:$0xff]
  %v252 = vld [vmem:[%s3 + $0x90] sm:$0xff]
  %v253 = vld [vmem:[%s3 + $0x98] sm:$0xff]
  %v254 = vld [vmem:[%s3 + $0xa0] sm:$0xff]
  %v255 = vld [vmem:[%s3 + $0xa8] sm:$0xff]
  %v256 = vld [vmem:[%s3 + $0xb0] sm:$0xff]
  %v257 = vld [vmem:[%s3 + $0xb8] sm:$0xff]
  %v258 = vld [vmem:[%s3 + $0xc0] sm:$0xff]
  %v259 = vld [vmem:[%s3 + $0xc8] sm:$0xff]
  %v260 = vld [vmem:[%s3 + $0xd0] sm:$0xff]
  %v261 = vld [vmem:[%s3 + $0xd8] sm:$0xff]
  %v262 = vld [vmem:[%s3 + $0xe0] sm:$0xff]
  %v263 = vld [vmem:[%s3 + $0xe8] sm:$0xff]
  %v264 = vld [vmem:[%s3 + $0xf0] sm:$0xff]
  %v265 = vld [vmem:[%s3 + $0xf8] sm:$0xff]
  %v266 = vld [vmem:[%s3 + $0x100] sm:$0xff]
  %v267 = vld [vmem:[%s3 + $0x108] sm:$0xff]
  %v268 = vld [vmem:[%s3 + $0x110] sm:$0xff]
  %v269 = vld [vmem:[%s3 + $0x118] sm:$0xff]
  %v270 = vld [vmem:[%s3 + $0x120] sm:$0xff]
  %v271 = vld [vmem:[%s3 + $0x128] sm:$0xff]
  %v272 = vld [vmem:[%s3 + $0x130] sm:$0xff]
  %v273 = vld [vmem:[%s3 + $0x138] sm:$0xff]
  %v274 = vld [vmem:[%s3 + $0x140] sm:$0xff]
  %v275 = vld [vmem:[%s3 + $0x148] sm:$0xff]
  %v276 = vld [vmem:[%s3 + $0x150] sm:$0xff]
  %v277 = vld [vmem:[%s3 + $0x158] sm:$0xff]
  %v278 = vld [vmem:[%s3 + $0x160] sm:$0xff]
  %v279 = vld [vmem:[%s3 + $0x168] sm:$0xff]
  %v280 = vld [vmem:[%s3 + $0x170] sm:$0xff]
  %v281 = vld [vmem:[%s3 + $0x178] sm:$0xff]
  %v282 = vld [vmem:[%s3 + $0x180] sm:$0xff]
  %v283 = vld [vmem:[%s3 + $0x188] sm:$0xff]
  %v284 = vld [vmem:[%s3 + $0x190] sm:$0xff]
  %v285 = vld [vmem:[%s3 + $0x198] sm:$0xff]
  %v286 = vld [vmem:[%s3 + $0x1a0] sm:$0xff]
  %v287 = vld [vmem:[%s3 + $0x1a8] sm:$0xff]
  %v288 = vld [vmem:[%s3 + $0x1b0] sm:$0xff]
  %v289 = vld [vmem:[%s3 + $0x1b8] sm:$0xff]
  %v290 = vld [vmem:[%s3 + $0x1c0] sm:$0xff]
  %v291 = vld [vmem:[%s3 + $0x1c8] sm:$0xff]
  %v292 = vld [vmem:[%s3 + $0x1d0] sm:$0xff]
  %v293 = vld [vmem:[%s3 + $0x1d8] sm:$0xff]
  %v294 = vld [vmem:[%s3 + $0x1e0] sm:$0xff]
  %v295 = vld [vmem:[%s3 + $0x1e8] sm:$0xff]
  %v296 = vld [vmem:[%s3 + $0x1f0] sm:$0xff]
  %v297 = vld [vmem:[%s3 + $0x1f8] sm:$0xff]
  %v298 = vld [vmem:[%s3 + $0x200] sm:$0xff]
  %v299 = vld [vmem:[%s3 + $0x208] sm:$0xff]
  %v300 = vld [vmem:[%s3 + $0x210] sm:$0xff]
  %v301 = vld [vmem:[%s3 + $0x218] sm:$0xff]
  %v302 = vld [vmem:[%s3 + $0x220] sm:$0xff]
  %v303 = vld [vmem:[%s3 + $0x228] sm:$0xff]
  %v304 = vld [vmem:[%s3 + $0x230] sm:$0xff]
  %v305 = vld [vmem:[%s3 + $0x238] sm:$0xff]
  %v306 = vld [vmem:[%s3 + $0x240] sm:$0xff]
  %v307 = vld [vmem:[%s3 + $0x248] sm:$0xff]
  %v308 = vld [vmem:[%s3 + $0x250] sm:$0xff]
  %v309 = vld [vmem:[%s3 + $0x258] sm:$0xff]
  %v310 = vld [vmem:[%s3 + $0x260] sm:$0xff]
  %v311 = vld [vmem:[%s3 + $0x268] sm:$0xff]
  %v312 = vld [vmem:[%s3 + $0x270] sm:$0xff]
  %v313 = vld [vmem:[%s3 + $0x278] sm:$0xff]
  %v314 = vld [vmem:[%s3 + $0x280] sm:$0xff]
  %v315 = vld [vmem:[%s3 + $0x288] sm:$0xff]
  %v316 = vld [vmem:[%s3 + $0x290] sm:$0xff]
  %v317 = vld [vmem:[%s3 + $0x298] sm:$0xff]
  %v318 = vld [vmem:[%s3 + $0x2a0] sm:$0xff]
  %v319 = vld [vmem:[%s3 + $0x2a8] sm:$0xff]
  %v320 = vld [vmem:[%s3 + $0x2b0] sm:$0xff]
  %v321 = vld [vmem:[%s3 + $0x2b8] sm:$0xff]
  %v322 = vld [vmem:[%s3 + $0x2c0] sm:$0xff]
  %v323 = vld [vmem:[%s3 + $0x2c8] sm:$0xff]
  %v324 = vld [vmem:[%s3 + $0x2d0] sm:$0xff]
  %v325 = vld [vmem:[%s3 + $0x2d8] sm:$0xff]
  %v326 = vld [vmem:[%s3 + $0x2e0] sm:$0xff]
  %v327 = vld [vmem:[%s3 + $0x2e8] sm:$0xff]
  %v328 = vld [vmem:[%s3 + $0x2f0] sm:$0xff]
  %v329 = vld [vmem:[%s3 + $0x2f8] sm:$0xff]
  %v330 = vld [vmem:[%s3 + $0x300] sm:$0xff]
  %v331 = vld [vmem:[%s3 + $0x308] sm:$0xff]
  %v332 = vld [vmem:[%s3 + $0x310] sm:$0xff]
  %v333 = vld [vmem:[%s3 + $0x318] sm:$0xff]
  %v334 = vld [vmem:[%s3 + $0x320] sm:$0xff]
  %v335 = vld [vmem:[%s3 + $0x328] sm:$0xff]
  %v336 = vld [vmem:[%s3 + $0x330] sm:$0xff]
  %v337 = vld [vmem:[%s3 + $0x338] sm:$0xff]
  %v338 = vld [vmem:[%s3 + $0x340] sm:$0xff]
  %v339 = vld [vmem:[%s3 + $0x348] sm:$0xff]
  %v340 = vld [vmem:[%s3 + $0x350] sm:$0xff]
  %v341 = vld [vmem:[%s3 + $0x358] sm:$0xff]
  %v342 = vld [vmem:[%s3 + $0x360] sm:$0xff]
  %v343 = vld [vmem:[%s3 + $0x368] sm:$0xff]
  %v344 = vld [vmem:[%s3 + $0x370] sm:$0xff]
  %v345 = vld [vmem:[%s3 + $0x378] sm:$0xff]
  %v346 = vld [vmem:[%s3 + $0x380] sm:$0xff]
  %v347 = vld [vmem:[%s3 + $0x388] sm:$0xff]
  %v348 = vld [vmem:[%s3 + $0x390] sm:$0xff]
  %v349 = vld [vmem:[%s3 + $0x398] sm:$0xff]
  %v350 = vld [vmem:[%s3 + $0x3a0] sm:$0xff]
  %v351 = vld [vmem:[%s3 + $0x3a8] sm:$0xff]
  %v352 = vld [vmem:[%s3 + $0x3b0] sm:$0xff]
  %v353 = vld [vmem:[%s3 + $0x3b8] sm:$0xff]
  %v354 = vld [vmem:[%s3 + $0x3c0] sm:$0xff]
  %v355 = vld [vmem:[%s3 + $0x3c8] sm:$0xff]
  %v356 = vld [vmem:[%s3 + $0x3d0] sm:$0xff]
  %v357 = vld [vmem:[%s3 + $0x3d8] sm:$0xff]
  %v358 = vld [vmem:[%s3 + $0x3e0] sm:$0xff]
  %v359 = vld [vmem:[%s3 + $0x3e8] sm:$0xff]
  %v360 = vld [vmem:[%s3 + $0x3f0] sm:$0xff]
  %v361 = vld [vmem:[%s3 + $0x3f8] sm:$0xff]
  %v362 = vld [vmem:[%s4] sm:$0xf]
  %v364 = vlaneseq
  %v365 = vshrl.u32 %v364, 7
  %v366 = vsub.s32 0, %v365
  %v367 = vrot.slane %v362, %v366
  %v368 = vlaneseq
  %v369 = vshrl.u32 %v368, 7
  %v370 = vsub.s32 1, %v369
  %v371 = vrot.slane %v362, %v370
  %v372 = vlaneseq
  %v373 = vshrl.u32 %v372, 7
  %v374 = vsub.s32 2, %v373
  %v375 = vrot.slane %v362, %v374
  %v376 = vlaneseq
  %v377 = vshrl.u32 %v376, 7
  %v378 = vsub.s32 3, %v377
  %v379 = vrot.slane %v362, %v378
  %v512 = vunpack.c.l.b16 %v234
  %v513 = vunpack.c.h.b16 %v234
  %v514 = vunpack.c.l.b16 %v235
  %v515 = vunpack.c.h.b16 %v235
  %v516 = vunpack.c.l.b16 %v236
  %v517 = vunpack.c.h.b16 %v236
  %v518 = vunpack.c.l.b16 %v237
  %v519 = vunpack.c.h.b16 %v237
  %v520 = vunpack.c.l.b16 %v238
  %v521 = vunpack.c.h.b16 %v238
  %v522 = vunpack.c.l.b16 %v239
  %v523 = vunpack.c.h.b16 %v239
  %v524 = vunpack.c.l.b16 %v240
  %v525 = vunpack.c.h.b16 %v240
  %v526 = vunpack.c.l.b16 %v241
  %v527 = vunpack.c.h.b16 %v241
  %v528 = vunpack.c.l.b16 %v242
  %v529 = vunpack.c.h.b16 %v242
  %v530 = vunpack.c.l.b16 %v243
  %v531 = vunpack.c.h.b16 %v243
  %v532 = vunpack.c.l.b16 %v244
  %v533 = vunpack.c.h.b16 %v244
  %v534 = vunpack.c.l.b16 %v245
  %v535 = vunpack.c.h.b16 %v245
  %v536 = vunpack.c.l.b16 %v246
  %v537 = vunpack.c.h.b16 %v246
  %v538 = vunpack.c.l.b16 %v247
  %v539 = vunpack.c.h.b16 %v247
  %v540 = vunpack.c.l.b16 %v248
  %v541 = vunpack.c.h.b16 %v248
  %v542 = vunpack.c.l.b16 %v249
  %v543 = vunpack.c.h.b16 %v249
  %v544 = vunpack.c.l.b16 %v250
  %v545 = vunpack.c.h.b16 %v250
  %v546 = vunpack.c.l.b16 %v251
  %v547 = vunpack.c.h.b16 %v251
  %v548 = vunpack.c.l.b16 %v252
  %v549 = vunpack.c.h.b16 %v252
  %v550 = vunpack.c.l.b16 %v253
  %v551 = vunpack.c.h.b16 %v253
  %v552 = vunpack.c.l.b16 %v254
  %v553 = vunpack.c.h.b16 %v254
  %v554 = vunpack.c.l.b16 %v255
  %v555 = vunpack.c.h.b16 %v255
  %v556 = vunpack.c.l.b16 %v256
  %v557 = vunpack.c.h.b16 %v256
  %v558 = vunpack.c.l.b16 %v257
  %v559 = vunpack.c.h.b16 %v257
  %v560 = vunpack.c.l.b16 %v258
  %v561 = vunpack.c.h.b16 %v258
  %v562 = vunpack.c.l.b16 %v259
  %v563 = vunpack.c.h.b16 %v259
  %v564 = vunpack.c.l.b16 %v260
  %v565 = vunpack.c.h.b16 %v260
  %v566 = vunpack.c.l.b16 %v261
  %v567 = vunpack.c.h.b16 %v261
  %v568 = vunpack.c.l.b16 %v262
  %v569 = vunpack.c.h.b16 %v262
  %v570 = vunpack.c.l.b16 %v263
  %v571 = vunpack.c.h.b16 %v263
  %v572 = vunpack.c.l.b16 %v264
  %v573 = vunpack.c.h.b16 %v264
  %v574 = vunpack.c.l.b16 %v265
  %v575 = vunpack.c.h.b16 %v265
  %v576 = vunpack.c.l.b16 %v266
  %v577 = vunpack.c.h.b16 %v266
  %v578 = vunpack.c.l.b16 %v267
  %v579 = vunpack.c.h.b16 %v267
  %v580 = vunpack.c.l.b16 %v268
  %v581 = vunpack.c.h.b16 %v268
  %v582 = vunpack.c.l.b16 %v269
  %v583 = vunpack.c.h.b16 %v269
  %v584 = vunpack.c.l.b16 %v270
  %v585 = vunpack.c.h.b16 %v270
  %v586 = vunpack.c.l.b16 %v271
  %v587 = vunpack.c.h.b16 %v271
  %v588 = vunpack.c.l.b16 %v272
  %v589 = vunpack.c.h.b16 %v272
  %v590 = vunpack.c.l.b16 %v273
  %v591 = vunpack.c.h.b16 %v273
  %v592 = vunpack.c.l.b16 %v274
  %v593 = vunpack.c.h.b16 %v274
  %v594 = vunpack.c.l.b16 %v275
  %v595 = vunpack.c.h.b16 %v275
  %v596 = vunpack.c.l.b16 %v276
  %v597 = vunpack.c.h.b16 %v276
  %v598 = vunpack.c.l.b16 %v277
  %v599 = vunpack.c.h.b16 %v277
  %v600 = vunpack.c.l.b16 %v278
  %v601 = vunpack.c.h.b16 %v278
  %v602 = vunpack.c.l.b16 %v279
  %v603 = vunpack.c.h.b16 %v279
  %v604 = vunpack.c.l.b16 %v280
  %v605 = vunpack.c.h.b16 %v280
  %v606 = vunpack.c.l.b16 %v281
  %v607 = vunpack.c.h.b16 %v281
  %v608 = vunpack.c.l.b16 %v282
  %v609 = vunpack.c.h.b16 %v282
  %v610 = vunpack.c.l.b16 %v283
  %v611 = vunpack.c.h.b16 %v283
  %v612 = vunpack.c.l.b16 %v284
  %v613 = vunpack.c.h.b16 %v284
  %v614 = vunpack.c.l.b16 %v285
  %v615 = vunpack.c.h.b16 %v285
  %v616 = vunpack.c.l.b16 %v286
  %v617 = vunpack.c.h.b16 %v286
  %v618 = vunpack.c.l.b16 %v287
  %v619 = vunpack.c.h.b16 %v287
  %v620 = vunpack.c.l.b16 %v288
  %v621 = vunpack.c.h.b16 %v288
  %v622 = vunpack.c.l.b16 %v289
  %v623 = vunpack.c.h.b16 %v289
  %v624 = vunpack.c.l.b16 %v290
  %v625 = vunpack.c.h.b16 %v290
  %v626 = vunpack.c.l.b16 %v291
  %v627 = vunpack.c.h.b16 %v291
  %v628 = vunpack.c.l.b16 %v292
  %v629 = vunpack.c.h.b16 %v292
  %v630 = vunpack.c.l.b16 %v293
  %v631 = vunpack.c.h.b16 %v293
  %v632 = vunpack.c.l.b16 %v294
  %v633 = vunpack.c.h.b16 %v294
  %v634 = vunpack.c.l.b16 %v295
  %v635 = vunpack.c.h.b16 %v295
  %v636 = vunpack.c.l.b16 %v296
  %v637 = vunpack.c.h.b16 %v296
  %v638 = vunpack.c.l.b16 %v297
  %v639 = vunpack.c.h.b16 %v297
  %v640 = vunpack.c.l.b16 %v298
  %v641 = vunpack.c.h.b16 %v298
  %v642 = vunpack.c.l.b16 %v299
  %v643 = vunpack.c.h.b16 %v299
  %v644 = vunpack.c.l.b16 %v300
  %v645 = vunpack.c.h.b16 %v300
  %v646 = vunpack.c.l.b16 %v301
  %v647 = vunpack.c.h.b16 %v301
  %v648 = vunpack.c.l.b16 %v302
  %v649 = vunpack.c.h.b16 %v302
  %v650 = vunpack.c.l.b16 %v303
  %v651 = vunpack.c.h.b16 %v303
  %v652 = vunpack.c.l.b16 %v304
  %v653 = vunpack.c.h.b16 %v304
  %v654 = vunpack.c.l.b16 %v305
  %v655 = vunpack.c.h.b16 %v305
  %v656 = vunpack.c.l.b16 %v306
  %v657 = vunpack.c.h.b16 %v306
  %v658 = vunpack.c.l.b16 %v307
  %v659 = vunpack.c.h.b16 %v307
  %v660 = vunpack.c.l.b16 %v308
  %v661 = vunpack.c.h.b16 %v308
  %v662 = vunpack.c.l.b16 %v309
  %v663 = vunpack.c.h.b16 %v309
  %v664 = vunpack.c.l.b16 %v310
  %v665 = vunpack.c.h.b16 %v310
  %v666 = vunpack.c.l.b16 %v311
  %v667 = vunpack.c.h.b16 %v311
  %v668 = vunpack.c.l.b16 %v312
  %v669 = vunpack.c.h.b16 %v312
  %v670 = vunpack.c.l.b16 %v313
  %v671 = vunpack.c.h.b16 %v313
  %v672 = vunpack.c.l.b16 %v314
  %v673 = vunpack.c.h.b16 %v314
  %v674 = vunpack.c.l.b16 %v315
  %v675 = vunpack.c.h.b16 %v315
  %v676 = vunpack.c.l.b16 %v316
  %v677 = vunpack.c.h.b16 %v316
  %v678 = vunpack.c.l.b16 %v317
  %v679 = vunpack.c.h.b16 %v317
  %v680 = vunpack.c.l.b16 %v318
  %v681 = vunpack.c.h.b16 %v318
  %v682 = vunpack.c.l.b16 %v319
  %v683 = vunpack.c.h.b16 %v319
  %v684 = vunpack.c.l.b16 %v320
  %v685 = vunpack.c.h.b16 %v320
  %v686 = vunpack.c.l.b16 %v321
  %v687 = vunpack.c.h.b16 %v321
  %v688 = vunpack.c.l.b16 %v322
  %v689 = vunpack.c.h.b16 %v322
  %v690 = vunpack.c.l.b16 %v323
  %v691 = vunpack.c.h.b16 %v323
  %v692 = vunpack.c.l.b16 %v324
  %v693 = vunpack.c.h.b16 %v324
  %v694 = vunpack.c.l.b16 %v325
  %v695 = vunpack.c.h.b16 %v325
  %v696 = vunpack.c.l.b16 %v326
  %v697 = vunpack.c.h.b16 %v326
  %v698 = vunpack.c.l.b16 %v327
  %v699 = vunpack.c.h.b16 %v327
  %v700 = vunpack.c.l.b16 %v328
  %v701 = vunpack.c.h.b16 %v328
  %v702 = vunpack.c.l.b16 %v329
  %v703 = vunpack.c.h.b16 %v329
  %v704 = vunpack.c.l.b16 %v330
  %v705 = vunpack.c.h.b16 %v330
  %v706 = vunpack.c.l.b16 %v331
  %v707 = vunpack.c.h.b16 %v331
  %v708 = vunpack.c.l.b16 %v332
  %v709 = vunpack.c.h.b16 %v332
  %v710 = vunpack.c.l.b16 %v333
  %v711 = vunpack.c.h.b16 %v333
  %v712 = vunpack.c.l.b16 %v334
  %v713 = vunpack.c.h.b16 %v334
  %v714 = vunpack.c.l.b16 %v335
  %v715 = vunpack.c.h.b16 %v335
  %v716 = vunpack.c.l.b16 %v336
  %v717 = vunpack.c.h.b16 %v336
  %v718 = vunpack.c.l.b16 %v337
  %v719 = vunpack.c.h.b16 %v337
  %v720 = vunpack.c.l.b16 %v338
  %v721 = vunpack.c.h.b16 %v338
  %v722 = vunpack.c.l.b16 %v339
  %v723 = vunpack.c.h.b16 %v339
  %v724 = vunpack.c.l.b16 %v340
  %v725 = vunpack.c.h.b16 %v340
  %v726 = vunpack.c.l.b16 %v341
  %v727 = vunpack.c.h.b16 %v341
  %v728 = vunpack.c.l.b16 %v342
  %v729 = vunpack.c.h.b16 %v342
  %v730 = vunpack.c.l.b16 %v343
  %v731 = vunpack.c.h.b16 %v343
  %v732 = vunpack.c.l.b16 %v344
  %v733 = vunpack.c.h.b16 %v344
  %v734 = vunpack.c.l.b16 %v345
  %v735 = vunpack.c.h.b16 %v345
  %v736 = vunpack.c.l.b16 %v346
  %v737 = vunpack.c.h.b16 %v346
  %v738 = vunpack.c.l.b16 %v347
  %v739 = vunpack.c.h.b16 %v347
  %v740 = vunpack.c.l.b16 %v348
  %v741 = vunpack.c.h.b16 %v348
  %v742 = vunpack.c.l.b16 %v349
  %v743 = vunpack.c.h.b16 %v349
  %v744 = vunpack.c.l.b16 %v350
  %v745 = vunpack.c.h.b16 %v350
  %v746 = vunpack.c.l.b16 %v351
  %v747 = vunpack.c.h.b16 %v351
  %v748 = vunpack.c.l.b16 %v352
  %v749 = vunpack.c.h.b16 %v352
  %v750 = vunpack.c.l.b16 %v353
  %v751 = vunpack.c.h.b16 %v353
  %v752 = vunpack.c.l.b16 %v354
  %v753 = vunpack.c.h.b16 %v354
  %v754 = vunpack.c.l.b16 %v355
  %v755 = vunpack.c.h.b16 %v355
  %v756 = vunpack.c.l.b16 %v356
  %v757 = vunpack.c.h.b16 %v356
  %v758 = vunpack.c.l.b16 %v357
  %v759 = vunpack.c.h.b16 %v357
  %v760 = vunpack.c.l.b16 %v358
  %v761 = vunpack.c.h.b16 %v358
  %v762 = vunpack.c.l.b16 %v359
  %v763 = vunpack.c.h.b16 %v359
  %v764 = vunpack.c.l.b16 %v360
  %v765 = vunpack.c.h.b16 %v360
  %v766 = vunpack.c.l.b16 %v361
  %v767 = vunpack.c.h.b16 %v361
  %v768 = vpack.c.b16 %v516, %v512
  %v769 = vpack.c.b16 %v517, %v513
  %v770 = vpack.c.b16 %v518, %v514
  %v771 = vpack.c.b16 %v519, %v515
  %v772 = vpack.c.b16 %v524, %v520
  %v773 = vpack.c.b16 %v525, %v521
  %v774 = vpack.c.b16 %v526, %v522
  %v775 = vpack.c.b16 %v527, %v523
  %v776 = vpack.c.b16 %v532, %v528
  %v777 = vpack.c.b16 %v533, %v529
  %v778 = vpack.c.b16 %v534, %v530
  %v779 = vpack.c.b16 %v535, %v531
  %v780 = vpack.c.b16 %v540, %v536
  %v781 = vpack.c.b16 %v541, %v537
  %v782 = vpack.c.b16 %v542, %v538
  %v783 = vpack.c.b16 %v543, %v539
  %v784 = vpack.c.b16 %v548, %v544
  %v785 = vpack.c.b16 %v549, %v545
  %v786 = vpack.c.b16 %v550, %v546
  %v787 = vpack.c.b16 %v551, %v547
  %v788 = vpack.c.b16 %v556, %v552
  %v789 = vpack.c.b16 %v557, %v553
  %v790 = vpack.c.b16 %v558, %v554
  %v791 = vpack.c.b16 %v559, %v555
  %v792 = vpack.c.b16 %v564, %v560
  %v793 = vpack.c.b16 %v565, %v561
  %v794 = vpack.c.b16 %v566, %v562
  %v795 = vpack.c.b16 %v567, %v563
  %v796 = vpack.c.b16 %v572, %v568
  %v797 = vpack.c.b16 %v573, %v569
  %v798 = vpack.c.b16 %v574, %v570
  %v799 = vpack.c.b16 %v575, %v571
  %v800 = vpack.c.b16 %v580, %v576
  %v801 = vpack.c.b16 %v581, %v577
  %v802 = vpack.c.b16 %v582, %v578
  %v803 = vpack.c.b16 %v583, %v579
  %v804 = vpack.c.b16 %v588, %v584
  %v805 = vpack.c.b16 %v589, %v585
  %v806 = vpack.c.b16 %v590, %v586
  %v807 = vpack.c.b16 %v591, %v587
  %v808 = vpack.c.b16 %v596, %v592
  %v809 = vpack.c.b16 %v597, %v593
  %v810 = vpack.c.b16 %v598, %v594
  %v811 = vpack.c.b16 %v599, %v595
  %v812 = vpack.c.b16 %v604, %v600
  %v813 = vpack.c.b16 %v605, %v601
  %v814 = vpack.c.b16 %v606, %v602
  %v815 = vpack.c.b16 %v607, %v603
  %v816 = vpack.c.b16 %v612, %v608
  %v817 = vpack.c.b16 %v613, %v609
  %v818 = vpack.c.b16 %v614, %v610
  %v819 = vpack.c.b16 %v615, %v611
  %v820 = vpack.c.b16 %v620, %v616
  %v821 = vpack.c.b16 %v621, %v617
  %v822 = vpack.c.b16 %v622, %v618
  %v823 = vpack.c.b16 %v623, %v619
  %v824 = vpack.c.b16 %v628, %v624
  %v825 = vpack.c.b16 %v629, %v625
  %v826 = vpack.c.b16 %v630, %v626
  %v827 = vpack.c.b16 %v631, %v627
  %v828 = vpack.c.b16 %v636, %v632
  %v829 = vpack.c.b16 %v637, %v633
  %v830 = vpack.c.b16 %v638, %v634
  %v831 = vpack.c.b16 %v639, %v635
  %v832 = vpack.c.b16 %v644, %v640
  %v833 = vpack.c.b16 %v645, %v641
  %v834 = vpack.c.b16 %v646, %v642
  %v835 = vpack.c.b16 %v647, %v643
  %v836 = vpack.c.b16 %v652, %v648
  %v837 = vpack.c.b16 %v653, %v649
  %v838 = vpack.c.b16 %v654, %v650
  %v839 = vpack.c.b16 %v655, %v651
  %v840 = vpack.c.b16 %v660, %v656
  %v841 = vpack.c.b16 %v661, %v657
  %v842 = vpack.c.b16 %v662, %v658
  %v843 = vpack.c.b16 %v663, %v659
  %v844 = vpack.c.b16 %v668, %v664
  %v845 = vpack.c.b16 %v669, %v665
  %v846 = vpack.c.b16 %v670, %v666
  %v847 = vpack.c.b16 %v671, %v667
  %v848 = vpack.c.b16 %v676, %v672
  %v849 = vpack.c.b16 %v677, %v673
  %v850 = vpack.c.b16 %v678, %v674
  %v851 = vpack.c.b16 %v679, %v675
  %v852 = vpack.c.b16 %v684, %v680
  %v853 = vpack.c.b16 %v685, %v681
  %v854 = vpack.c.b16 %v686, %v682
  %v855 = vpack.c.b16 %v687, %v683
  %v856 = vpack.c.b16 %v692, %v688
  %v857 = vpack.c.b16 %v693, %v689
  %v858 = vpack.c.b16 %v694, %v690
  %v859 = vpack.c.b16 %v695, %v691
  %v860 = vpack.c.b16 %v700, %v696
  %v861 = vpack.c.b16 %v701, %v697
  %v862 = vpack.c.b16 %v702, %v698
  %v863 = vpack.c.b16 %v703, %v699
  %v864 = vpack.c.b16 %v708, %v704
  %v865 = vpack.c.b16 %v709, %v705
  %v866 = vpack.c.b16 %v710, %v706
  %v867 = vpack.c.b16 %v711, %v707
  %v868 = vpack.c.b16 %v716, %v712
  %v869 = vpack.c.b16 %v717, %v713
  %v870 = vpack.c.b16 %v718, %v714
  %v871 = vpack.c.b16 %v719, %v715
  %v872 = vpack.c.b16 %v724, %v720
  %v873 = vpack.c.b16 %v725, %v721
  %v874 = vpack.c.b16 %v726, %v722
  %v875 = vpack.c.b16 %v727, %v723
  %v876 = vpack.c.b16 %v732, %v728
  %v877 = vpack.c.b16 %v733, %v729
  %v878 = vpack.c.b16 %v734, %v730
  %v879 = vpack.c.b16 %v735, %v731
  %v880 = vpack.c.b16 %v740, %v736
  %v881 = vpack.c.b16 %v741, %v737
  %v882 = vpack.c.b16 %v742, %v738
  %v883 = vpack.c.b16 %v743, %v739
  %v884 = vpack.c.b16 %v748, %v744
  %v885 = vpack.c.b16 %v749, %v745
  %v886 = vpack.c.b16 %v750, %v746
  %v887 = vpack.c.b16 %v751, %v747
  %v888 = vpack.c.b16 %v756, %v752
  %v889 = vpack.c.b16 %v757, %v753
  %v890 = vpack.c.b16 %v758, %v754
  %v891 = vpack.c.b16 %v759, %v755
  %v892 = vpack.c.b16 %v764, %v760
  %v893 = vpack.c.b16 %v765, %v761
  %v894 = vpack.c.b16 %v766, %v762
  %v895 = vpack.c.b16 %v767, %v763
  %1024 = vmatprep.subr.bf16.mxu0 %v797
  %1025 = vmatpush1.bf16.msra.mxu0 %v796
  %1026 = vmatprep.subr.bf16.mxu0 %v793
  %1027 = vmatpush1.bf16.msra.mxu0 %v792
  %1028 = vmatprep.subr.bf16.mxu0 %v789
  %1029 = vmatpush1.bf16.msra.mxu0 %v788
  %1030 = vmatprep.subr.bf16.mxu0 %v785
  %1031 = vmatpush1.bf16.msra.mxu0 %v784
  %1032 = vmatprep.subr.bf16.mxu0 %v781
  %1033 = vmatpush1.bf16.msra.mxu0 %v780
  %1034 = vmatprep.subr.bf16.mxu0 %v777
  %1035 = vmatpush1.bf16.msra.mxu0 %v776
  %1036 = vmatprep.subr.bf16.mxu0 %v773
  %1037 = vmatpush1.bf16.msra.mxu0 %v772
  %1038 = vmatprep.subr.bf16.mxu0 %v769
  %1039 = vmatpush1.bf16.msra.mxu0 %v768
  %1040 = vmatprep.subr.bf16.mxu0 %v829
  %1041 = vmatpush2.bf16.msra.mxu0 %v828
  %1042 = vmatprep.subr.bf16.mxu0 %v825
  %1043 = vmatpush2.bf16.msra.mxu0 %v824
  %1044 = vmatprep.subr.bf16.mxu0 %v821
  %1045 = vmatpush2.bf16.msra.mxu0 %v820
  %1046 = vmatprep.subr.bf16.mxu0 %v817
  %1047 = vmatpush2.bf16.msra.mxu0 %v816
  %1048 = vmatprep.subr.bf16.mxu0 %v813
  %1049 = vmatpush2.bf16.msra.mxu0 %v812
  %1050 = vmatprep.subr.bf16.mxu0 %v809
  %1051 = vmatpush2.bf16.msra.mxu0 %v808
  %1052 = vmatprep.subr.bf16.mxu0 %v805
  %1053 = vmatpush2.bf16.msra.mxu0 %v804
  %1054 = vmatprep.subr.bf16.mxu0 %v801
  %1055 = vmatpush2.bf16.msra.mxu0 %v800
  %1056 = vmatprep.mubr.bf16.mxu0 %v231
  %1057 = vmatmul.mubr.bf16.gmra.mxu0 %v230
  %v1058 = vpop.f32.mrf.mxu0
  %v1059 = vadd.f32 %v367, %v1058
  %v1060 = vpop.f32.mrf.mxu0
  %v1061 = vadd.f32 %v371, %v1060
  %v1062 = vpop.f32.mrf.mxu0
  %v1063 = vpop.f32.mrf.mxu0
  %1064 = vdwg.mxu0
  %1065 = vmatprep.subr.bf16.mxu0 %v861
  %1066 = vmatpush1.bf16.msra.mxu0 %v860
  %1067 = vmatprep.subr.bf16.mxu0 %v857
  %1068 = vmatpush1.bf16.msra.mxu0 %v856
  %1069 = vmatprep.subr.bf16.mxu0 %v853
  %1070 = vmatpush1.bf16.msra.mxu0 %v852
  %1071 = vmatprep.subr.bf16.mxu0 %v849
  %1072 = vmatpush1.bf16.msra.mxu0 %v848
  %1073 = vmatprep.subr.bf16.mxu0 %v845
  %1074 = vmatpush1.bf16.msra.mxu0 %v844
  %1075 = vmatprep.subr.bf16.mxu0 %v841
  %1076 = vmatpush1.bf16.msra.mxu0 %v840
  %1077 = vmatprep.subr.bf16.mxu0 %v837
  %1078 = vmatpush1.bf16.msra.mxu0 %v836
  %1079 = vmatprep.subr.bf16.mxu0 %v833
  %1080 = vmatpush1.bf16.msra.mxu0 %v832
  %1081 = vmatprep.subr.bf16.mxu0 %v893
  %1082 = vmatpush2.bf16.msra.mxu0 %v892
  %1083 = vmatprep.subr.bf16.mxu0 %v889
  %1084 = vmatpush2.bf16.msra.mxu0 %v888
  %1085 = vmatprep.subr.bf16.mxu0 %v885
  %1086 = vmatpush2.bf16.msra.mxu0 %v884
  %1087 = vmatprep.subr.bf16.mxu0 %v881
  %1088 = vmatpush2.bf16.msra.mxu0 %v880
  %1089 = vmatprep.subr.bf16.mxu0 %v877
  %1090 = vmatpush2.bf16.msra.mxu0 %v876
  %1091 = vmatprep.subr.bf16.mxu0 %v873
  %1092 = vmatpush2.bf16.msra.mxu0 %v872
  %1093 = vmatprep.subr.bf16.mxu0 %v869
  %1094 = vmatpush2.bf16.msra.mxu0 %v868
  %1095 = vmatprep.subr.bf16.mxu0 %v865
  %1096 = vmatpush2.bf16.msra.mxu0 %v864
  %1097 = vmatprep.mubr.bf16.mxu0 %v233
  %1098 = vmatmul.mubr.bf16.gmra.mxu0 %v232
  %v1099 = vpop.f32.mrf.mxu0
  %v1100 = vadd.f32 %v1059, %v1099
  %v1101 = vpop.f32.mrf.mxu0
  %v1102 = vadd.f32 %v1061, %v1101
  %v1103 = vpop.f32.mrf.mxu0
  %v1104 = vpop.f32.mrf.mxu0
  %1105 = vdwg.mxu0
  %1106 = vmatprep.subr.bf16.mxu0 %v799
  %1107 = vmatpush1.bf16.msra.mxu0 %v798
  %1108 = vmatprep.subr.bf16.mxu0 %v795
  %1109 = vmatpush1.bf16.msra.mxu0 %v794
  %1110 = vmatprep.subr.bf16.mxu0 %v791
  %1111 = vmatpush1.bf16.msra.mxu0 %v790
  %1112 = vmatprep.subr.bf16.mxu0 %v787
  %1113 = vmatpush1.bf16.msra.mxu0 %v786
  %1114 = vmatprep.subr.bf16.mxu0 %v783
  %1115 = vmatpush1.bf16.msra.mxu0 %v782
  %1116 = vmatprep.subr.bf16.mxu0 %v779
  %1117 = vmatpush1.bf16.msra.mxu0 %v778
  %1118 = vmatprep.subr.bf16.mxu0 %v775
  %1119 = vmatpush1.bf16.msra.mxu0 %v774
  %1120 = vmatprep.subr.bf16.mxu0 %v771
  %1121 = vmatpush1.bf16.msra.mxu0 %v770
  %1122 = vmatprep.subr.bf16.mxu0 %v831
  %1123 = vmatpush2.bf16.msra.mxu0 %v830
  %1124 = vmatprep.subr.bf16.mxu0 %v827
  %1125 = vmatpush2.bf16.msra.mxu0 %v826
  %1126 = vmatprep.subr.bf16.mxu0 %v823
  %1127 = vmatpush2.bf16.msra.mxu0 %v822
  %1128 = vmatprep.subr.bf16.mxu0 %v819
  %1129 = vmatpush2.bf16.msra.mxu0 %v818
  %1130 = vmatprep.subr.bf16.mxu0 %v815
  %1131 = vmatpush2.bf16.msra.mxu0 %v814
  %1132 = vmatprep.subr.bf16.mxu0 %v811
  %1133 = vmatpush2.bf16.msra.mxu0 %v810
  %1134 = vmatprep.subr.bf16.mxu0 %v807
  %1135 = vmatpush2.bf16.msra.mxu0 %v806
  %1136 = vmatprep.subr.bf16.mxu0 %v803
  %1137 = vmatpush2.bf16.msra.mxu0 %v802
  %1138 = vmatprep.mubr.bf16.mxu0 %v231
  %1139 = vmatmul.mubr.bf16.gmra.mxu0 %v230
  %v1140 = vpop.f32.mrf.mxu0
  %v1141 = vadd.f32 %v375, %v1140
  %v1142 = vpop.f32.mrf.mxu0
  %v1143 = vadd.f32 %v379, %v1142
  %v1144 = vpop.f32.mrf.mxu0
  %v1145 = vpop.f32.mrf.mxu0
  %1146 = vdwg.mxu0
  %1147 = vmatprep.subr.bf16.mxu0 %v863
  %1148 = vmatpush1.bf16.msra.mxu0 %v862
  %1149 = vmatprep.subr.bf16.mxu0 %v859
  %1150 = vmatpush1.bf16.msra.mxu0 %v858
  %1151 = vmatprep.subr.bf16.mxu0 %v855
  %1152 = vmatpush1.bf16.msra.mxu0 %v854
  %1153 = vmatprep.subr.bf16.mxu0 %v851
  %1154 = vmatpush1.bf16.msra.mxu0 %v850
  %1155 = vmatprep.subr.bf16.mxu0 %v847
  %1156 = vmatpush1.bf16.msra.mxu0 %v846
  %1157 = vmatprep.subr.bf16.mxu0 %v843
  %1158 = vmatpush1.bf16.msra.mxu0 %v842
  %1159 = vmatprep.subr.bf16.mxu0 %v839
  %1160 = vmatpush1.bf16.msra.mxu0 %v838
  %1161 = vmatprep.subr.bf16.mxu0 %v835
  %1162 = vmatpush1.bf16.msra.mxu0 %v834
  %1163 = vmatprep.subr.bf16.mxu0 %v895
  %1164 = vmatpush2.bf16.msra.mxu0 %v894
  %1165 = vmatprep.subr.bf16.mxu0 %v891
  %1166 = vmatpush2.bf16.msra.mxu0 %v890
  %1167 = vmatprep.subr.bf16.mxu0 %v887
  %1168 = vmatpush2.bf16.msra.mxu0 %v886
  %1169 = vmatprep.subr.bf16.mxu0 %v883
  %1170 = vmatpush2.bf16.msra.mxu0 %v882
  %1171 = vmatprep.subr.bf16.mxu0 %v879
  %1172 = vmatpush2.bf16.msra.mxu0 %v878
  %1173 = vmatprep.subr.bf16.mxu0 %v875
  %1174 = vmatpush2.bf16.msra.mxu0 %v874
  %1175 = vmatprep.subr.bf16.mxu0 %v871
  %1176 = vmatpush2.bf16.msra.mxu0 %v870
  %1177 = vmatprep.subr.bf16.mxu0 %v867
  %1178 = vmatpush2.bf16.msra.mxu0 %v866
  %1179 = vmatprep.mubr.bf16.mxu0 %v233
  %1180 = vmatmul.mubr.bf16.gmra.mxu0 %v232
  %v1181 = vpop.f32.mrf.mxu0
  %v1182 = vadd.f32 %v1141, %v1181
  %v1183 = vpop.f32.mrf.mxu0
  %v1184 = vadd.f32 %v1143, %v1183
  %v1185 = vpop.f32.mrf.mxu0
  %v1186 = vpop.f32.mrf.mxu0
  %1187 = vdwg.mxu0
  %1188 = vst [vmem:[%s5] sm:$0xff] %v1100
  %1189 = vst [vmem:[%s5 + $0x8] sm:$0xff] %v1102
  %1190 = vst [vmem:[%s5 + $0x10] sm:$0xff] %v1182
  %1191 = vst [vmem:[%s5 + $0x18] sm:$0xff] %v1184
  // Predicated region
  $region22: #{atari_feature_model.7} parent=0 // pred_check
    _
  $region23: #{atari_feature_model.7} parent=0 // pred_check_branch
    %1193 = sbr.rel (0) target = $region25
  $region24: #{atari_feature_model.7} parent=0 // pred_region
    _
  $region25: #{atari_feature_model.7} parent=0 // pred_fallthru
    _
  // Predicated region
  $region26: #{atari_feature_model.7} parent=0 // pred_check
    _
  $region27: #{atari_feature_model.7} parent=0 // pred_check_branch
    %1195 = sbr.rel (0) target = $region29
  $region28: #{atari_feature_model.7} parent=0 // pred_region
    _
  $region29: #{atari_feature_model.7} parent=0 // pred_fallthru
    _

</llo_original>
